<compile_context>
chip_gen: v5e
topology: v5e:2x2
jax: 0.10.0
libtpu: 0.0.40
codegen_flags: <defaults>
</compile_context>

<pallas_src>
import functools

import jax
import jax.numpy as jnp
from jax.experimental import pallas as pl
from jax.experimental.pallas import tpu as pltpu


def _round_up(x, m):
    return (x + m - 1) // m * m


def _grid_invariant_spec(block_shape, index_map):
    """BlockSpec for a grid-invariant operand; single-buffered when supported."""
    try:
        return pl.BlockSpec(block_shape, index_map, pipeline_mode=pl.Buffered(1))
    except Exception:                                   # pragma: no cover
        return pl.BlockSpec(block_shape, index_map)


# ----------------------------- Pallas kernels --------------------------------
def _conv_prelu_fold_kernel(x_ref, w_ref, b_ref, a_ref, o_ref, *,
                            n_kh, n_kw, wp, th, w_out_pad, k_pad):
    """Small-Cin path: one matmul with K = KH*KW*cin_pad (padded to k_pad).

    x_ref: (win_rows*wp, cin_pad)  bf16  halo'd row window, spatial flattened
    w_ref: (k_pad, cout_pad)       bf16  im2col-folded weights
    b_ref, a_ref: (1, cout_pad)    f32   bias / PReLU slope
    o_ref: (th, w_out_pad, cout_pad)     output row block
    """
    cin_pad = x_ref.shape[-1]
    cout_pad = o_ref.shape[-1]
    m = th * wp

    taps = []
    for kh in range(n_kh):                              # unrolled, static offsets
        for kw in range(n_kw):
            off = kh * wp + kw
            taps.append(x_ref[off:off + m, :])          # (m, cin_pad) bf16
    k_used = n_kh * n_kw * cin_pad
    if k_pad > k_used:                                  # lane-pad K to k_pad
        taps.append(jnp.zeros((m, k_pad - k_used), x_ref.dtype))
    lhs = jnp.concatenate(taps, axis=-1)                # (m, k_pad) bf16, lane-dense

    y = jnp.dot(lhs, w_ref[...], preferred_element_type=jnp.float32)
    y = y + b_ref[...]                                  # bias
    y = jnp.where(y > 0.0, y, a_ref[...] * y)           # per-channel PReLU
    # Store only the valid (8-aligned) output columns -> smaller HBM writeback.
    o_ref[...] = y.reshape(th, wp, cout_pad)[:, :w_out_pad, :].astype(o_ref.dtype)


def _conv_prelu_taps_kernel(x_ref, w_ref, b_ref, a_ref, o_ref, acc_ref, *,
                            n_kh, n_kw, wp, th, w_out_pad):
    """Large-Cin path (K >= 128 per tap): per-tap dots, ref accumulation."""
    cout_pad = o_ref.shape[-1]
    m = th * wp
    acc_ref[...] = jnp.broadcast_to(b_ref[...], (m, cout_pad))   # init with bias
    for kh in range(n_kh):
        for kw in range(n_kw):
            off = kh * wp + kw
            acc_ref[...] += jnp.dot(x_ref[off:off + m, :], w_ref[kh, kw],
                                    preferred_element_type=jnp.float32)
    y = acc_ref[...]
    y = jnp.where(y > 0.0, y, a_ref[...] * y)
    o_ref[...] = y.reshape(th, wp, cout_pad)[:, :w_out_pad, :].astype(o_ref.dtype)


# ------------------------------ JAX wrapper -----------------------------------
def pz_conv2d_forward(x, weight, bias, alpha, *, stride=1, padding=1,
                      tile_rows=None, out_dtype=jnp.float32):
    """PzConv2d forward: Conv2d(bias=True) + per-channel PReLU.

    x:      (N, Cin, H, W)      f32, NCHW (PyTorch convention)
    weight: (Cout, Cin, KH, KW) f32
    bias:   (Cout,)             f32
    alpha:  (Cout,)             f32
    returns (N, Cout, Hout, Wout) `out_dtype`, NCHW
    (out_dtype=jnp.bfloat16 halves the writeback on v5e if the consumer allows.)
    """
    if stride != 1:
        # TODO(synk): stride > 1 needs strided output-row gathers; not implemented.
        raise NotImplementedError("fused PzConv2d kernel supports stride=1 only")

    n, cin, h, w = x.shape
    cout, cin_w, k_h, k_w = weight.shape
    assert cin_w == cin

    h_out = h + 2 * padding - k_h + 1
    w_out = w + 2 * padding - k_w + 1
    wp = _round_up(w + 2 * padding, 8)                  # sublane-aligned row pitch
    w_out_pad = _round_up(w_out, 8)                     # 8-aligned stored columns

    fold = _round_up(cin, 8) < 128                      # K-fold pays off for small Cin
    cin_pad = _round_up(cin, 8) if fold else _round_up(cin, 16)
    k_used = k_h * k_w * cin_pad
    k_pad = _round_up(k_used, 128)
    # Fill the 256-wide MXU (v6e/v7x) when Cout > 128; 128 lanes otherwise.
    cout_pad = _round_up(cout, 128) if cout <= 128 else _round_up(cout, 256)
    out_itemsize = jnp.dtype(out_dtype).itemsize

    # ---- device-aware VMEM budget & tile choice ------------------------------
    try:
        vmem_cap = int(pltpu.get_tpu_info().vmem_capacity_bytes)
    except Exception:                                   # pragma: no cover
        vmem_cap = 64 * 1024 * 1024                     # v7x per-TC, conservative
    vmem_limit = min(int(vmem_cap * 0.8), vmem_cap - 8 * 1024 * 1024)
    block_budget = max(vmem_limit - 6 * 1024 * 1024, 8 * 1024 * 1024)

    def _step_bytes(th_):
        m_ = th_ * wp
        lane = 128                                      # VMEM minor dims lane-pad to 128
        in_b = 2 * (th_ + k_h) * wp * max(cin_pad, lane) * 2      # 2-buffered bf16 window
        out_b = 2 * th_ * w_out_pad * cout_pad * out_itemsize     # 2-buffered output
        if fold:
            w_b = k_pad * cout_pad * 2
            tmp = m_ * k_pad * 2 + m_ * cout_pad * 4              # folded LHS + f32 result
        else:
            w_b = k_h * k_w * cin_pad * cout_pad * 2
            tmp = m_ * cout_pad * 4 + m_ * max(cin_pad, lane) * 2  # acc scratch + tap tile
        return in_b + out_b + w_b + tmp + 4 * cout_pad * 4

    if tile_rows is None:
        target_pixels = 8192 if vmem_cap >= 96 * 1024 * 1024 else 4096
        th = max(1, min(h_out, target_pixels // max(wp, 1)))
        while th > 1 and _step_bytes(th) > block_budget:
            th -= 1
    else:
        th = max(1, min(tile_rows, h_out))

    n_row_blocks = pl.cdiv(h_out, th)
    h_out_pad = n_row_blocks * th
    win_rows = th + k_h                 # (k_h-1) halo rows + 1 slack row (kw shift)
    hp_rows = h_out_pad + k_h           # padded-image rows the last window touches

    # ---- data prep: NCHW -> padded NHWC -> halo'd row windows (bf16) ---------
    x_nhwc = jnp.transpose(x, (0, 2, 3, 1))
    x_p = jnp.pad(
        x_nhwc,
        ((0, 0),
         (padding, hp_rows - h - padding),
         (padding, wp - w - padding),
         (0, cin_pad - cin)))                           # (n, hp_rows, wp, cin_pad)
    row_idx = (jnp.arange(n_row_blocks)[:, None] * th
               + jnp.arange(win_rows)[None, :])         # (blocks, win_rows)
    x_win = x_p[:, row_idx]                             # (n, blocks, win_rows, wp, cin_pad)
    x_win = x_win.reshape(n, n_row_blocks, win_rows * wp, cin_pad).astype(jnp.bfloat16)

    # Weights: (Cout, Cin, KH, KW) -> (KH, KW, Cin_pad, Cout_pad); folded path
    # reshapes to (k_pad, Cout_pad) matching the LHS concat order (kh, kw, c).
    w_r = jnp.transpose(weight, (2, 3, 1, 0))
    w_r = jnp.pad(w_r, ((0, 0), (0, 0), (0, cin_pad - cin), (0, cout_pad - cout)))
    if fold:
        w_arg = jnp.pad(w_r.reshape(k_used, cout_pad),
                        ((0, k_pad - k_used), (0, 0))).astype(jnp.bfloat16)
        w_spec = _grid_invariant_spec((k_pad, cout_pad), lambda i, j: (0, 0))
        kernel = functools.partial(_conv_prelu_fold_kernel, n_kh=k_h, n_kw=k_w,
                                   wp=wp, th=th, w_out_pad=w_out_pad, k_pad=k_pad)
        scratch = []
    else:
        w_arg = w_r.astype(jnp.bfloat16)
        w_spec = _grid_invariant_spec((k_h, k_w, cin_pad, cout_pad),
                                      lambda i, j: (0, 0, 0, 0))
        kernel = functools.partial(_conv_prelu_taps_kernel, n_kh=k_h, n_kw=k_w,
                                   wp=wp, th=th, w_out_pad=w_out_pad)
        scratch = [pltpu.VMEM((th * wp, cout_pad), jnp.float32)]

    b_p = jnp.pad(bias, (0, cout_pad - cout)).reshape(1, cout_pad).astype(jnp.float32)
    a_p = jnp.pad(alpha, (0, cout_pad - cout)).reshape(1, cout_pad).astype(jnp.float32)

    out = pl.pallas_call(
        kernel,
        out_shape=jax.ShapeDtypeStruct((n, h_out_pad, w_out_pad, cout_pad), out_dtype),
        grid_spec=pltpu.PrefetchScalarGridSpec(
            num_scalar_prefetch=0,
            grid=(n, n_row_blocks),
            in_specs=[
                # One halo'd row-window per grid step: VMEM bounded by the tile,
                # not the image, and both grid axes shard cleanly on megacore.
                pl.BlockSpec((None, None, win_rows * wp, cin_pad),
                             lambda i, j: (i, j, 0, 0)),
                w_spec,
                _grid_invariant_spec((1, cout_pad), lambda i, j: (0, 0)),
                _grid_invariant_spec((1, cout_pad), lambda i, j: (0, 0)),
            ],
            out_specs=pl.BlockSpec((None, th, w_out_pad, cout_pad),
                                   lambda i, j: (i, j, 0, 0)),
            scratch_shapes=scratch,
        ),
        compiler_params=pltpu.CompilerParams(
            dimension_semantics=("parallel", "parallel"),
            vmem_limit_bytes=vmem_limit),
    )(x_win, w_arg, b_p, a_p)

    out = out[:, :h_out, :w_out, :cout]
    # Keep the module's NCHW output contract (PyTorch).  In an NHWC pipeline
    # this transpose (and the input one) could be dropped.
    return jnp.transpose(out, (0, 3, 1, 2))


# ----------------------- deterministic parameter init -------------------------
def init_pz_conv2d_params(key, n_in_channels, n_out_channels, kernel_size=3):
    kw_, kb_, _ = jax.random.split(key, 3)
    k = kernel_size
    fan_in = n_in_channels * k * k
    fan_out = n_out_channels * k * k
    bound = (6.0 / (fan_in + fan_out)) ** 0.5          # xavier_uniform_
    weight = jax.random.uniform(
        kw_, (n_out_channels, n_in_channels, k, k),
        minval=-bound, maxval=bound, dtype=jnp.float32)
    bias = jnp.full((n_out_channels,), 0.1, dtype=jnp.float32)       # constant_
    alpha = jnp.full((n_out_channels,), 0.25, dtype=jnp.float32)     # PReLU init
    return weight, bias, alpha


# --------------------------------- main ----------------------------------------
if __name__ == "__main__":
    key = jax.random.PRNGKey(0)
    k_x, k_p = jax.random.split(key)

    N, Cin, H, W = 2, 4, 16, 16
    Cout, ksize, stride, padding = 8, 3, 1, 1

    x = jax.random.normal(k_x, (N, Cin, H, W), dtype=jnp.float32)
    weight, bias, alpha = init_pz_conv2d_params(k_p, Cin, Cout, ksize)

    fwd = jax.jit(functools.partial(pz_conv2d_forward, stride=stride,
                                    padding=padding))
    y = fwd(x, weight, bias, alpha)
    jax.block_until_ready(y)

    # Reference (XLA conv + PReLU), using the same bf16-rounded matmul inputs
    # so the only difference is f32 accumulation order.
    xb = x.astype(jnp.bfloat16).astype(jnp.float32)
    wb = weight.astype(jnp.bfloat16).astype(jnp.float32)
    y_conv = jax.lax.conv_general_dilated(
        xb, wb, window_strides=(stride, stride),
        padding=[(padding, padding), (padding, padding)],
        dimension_numbers=("NCHW", "OIHW", "NCHW"),
        precision=jax.lax.Precision.HIGHEST)
    y_conv = y_conv + bias.reshape(1, Cout, 1, 1)
    y_ref = jnp.where(y_conv > 0, y_conv, alpha.reshape(1, Cout, 1, 1) * y_conv)

    assert y.shape == (N, Cout, H, W)
    assert jnp.allclose(y, y_ref, atol=2e-3, rtol=2e-3), \
        float(jnp.max(jnp.abs(y - y_ref)))

    print("KERNEL_OK")
</pallas_src>

<mosaic_0001>
module attributes {stable_mosaic.version = 11 : i64} {
  func.func @_conv_prelu_fold_kernel(%arg0: i32, %arg1: i32, %arg2: memref<1x1x456x8xbf16, #tpu.memory_space<vmem>>, %arg3: memref<128x128xbf16, #tpu.memory_space<vmem>>, %arg4: memref<1x128xf32, #tpu.memory_space<vmem>>, %arg5: memref<1x128xf32, #tpu.memory_space<vmem>>, %arg6: memref<1x16x16x128xf32, #tpu.memory_space<vmem>>) attributes {dimension_semantics = [#tpu.dimension_semantics<parallel>, #tpu.dimension_semantics<parallel>], iteration_bounds = array<i64: 2, 1>, scalar_prefetch = 0 : i64, scratch_operands = 0 : i64, tpu.core_type = #tpu.core_type<tc>, window_params = [{transform_indices = @transform_0, window_bounds = array<i64: 1, 1, 456, 8>}, {pipeline_mode = #tpu.pipeline_mode<synchronous>, transform_indices = @transform_1, window_bounds = array<i64: 128, 128>}, {pipeline_mode = #tpu.pipeline_mode<synchronous>, transform_indices = @transform_2, window_bounds = array<i64: 1, 128>}, {pipeline_mode = #tpu.pipeline_mode<synchronous>, transform_indices = @transform_3, window_bounds = array<i64: 1, 128>}, {transform_indices = @transform_4, window_bounds = array<i64: 1, 16, 16, 128>}]} {
    %c0 = arith.constant 0 : index
    %c0_0 = arith.constant 0 : index
    %c0_1 = arith.constant 0 : index
    %c0_2 = arith.constant 0 : index
    %0 = vector.load %arg2[%c0, %c0_0, %c0_1, %c0_2] : memref<1x1x456x8xbf16, #tpu.memory_space<vmem>>, vector<1x1x384x8xbf16>
    %1 = vector.shape_cast %0 : vector<1x1x384x8xbf16> to vector<384x8xbf16>
    %c0_3 = arith.constant 0 : index
    %c0_4 = arith.constant 0 : index
    %c1 = arith.constant 1 : index
    %c0_5 = arith.constant 0 : index
    %2 = vector.load %arg2[%c0_3, %c0_4, %c1, %c0_5] : memref<1x1x456x8xbf16, #tpu.memory_space<vmem>>, vector<1x1x384x8xbf16>
    %3 = vector.shape_cast %2 : vector<1x1x384x8xbf16> to vector<384x8xbf16>
    %c0_6 = arith.constant 0 : index
    %c0_7 = arith.constant 0 : index
    %c2 = arith.constant 2 : index
    %c0_8 = arith.constant 0 : index
    %4 = vector.load %arg2[%c0_6, %c0_7, %c2, %c0_8] : memref<1x1x456x8xbf16, #tpu.memory_space<vmem>>, vector<1x1x384x8xbf16>
    %5 = vector.shape_cast %4 : vector<1x1x384x8xbf16> to vector<384x8xbf16>
    %c0_9 = arith.constant 0 : index
    %c0_10 = arith.constant 0 : index
    %c24 = arith.constant 24 : index
    %c0_11 = arith.constant 0 : index
    %6 = vector.load %arg2[%c0_9, %c0_10, %c24, %c0_11] : memref<1x1x456x8xbf16, #tpu.memory_space<vmem>>, vector<1x1x384x8xbf16>
    %7 = vector.shape_cast %6 : vector<1x1x384x8xbf16> to vector<384x8xbf16>
    %c0_12 = arith.constant 0 : index
    %c0_13 = arith.constant 0 : index
    %c25 = arith.constant 25 : index
    %c0_14 = arith.constant 0 : index
    %8 = vector.load %arg2[%c0_12, %c0_13, %c25, %c0_14] : memref<1x1x456x8xbf16, #tpu.memory_space<vmem>>, vector<1x1x384x8xbf16>
    %9 = vector.shape_cast %8 : vector<1x1x384x8xbf16> to vector<384x8xbf16>
    %c0_15 = arith.constant 0 : index
    %c0_16 = arith.constant 0 : index
    %c26 = arith.constant 26 : index
    %c0_17 = arith.constant 0 : index
    %10 = vector.load %arg2[%c0_15, %c0_16, %c26, %c0_17] : memref<1x1x456x8xbf16, #tpu.memory_space<vmem>>, vector<1x1x384x8xbf16>
    %11 = vector.shape_cast %10 : vector<1x1x384x8xbf16> to vector<384x8xbf16>
    %c0_18 = arith.constant 0 : index
    %c0_19 = arith.constant 0 : index
    %c48 = arith.constant 48 : index
    %c0_20 = arith.constant 0 : index
    %12 = vector.load %arg2[%c0_18, %c0_19, %c48, %c0_20] : memref<1x1x456x8xbf16, #tpu.memory_space<vmem>>, vector<1x1x384x8xbf16>
    %13 = vector.shape_cast %12 : vector<1x1x384x8xbf16> to vector<384x8xbf16>
    %c0_21 = arith.constant 0 : index
    %c0_22 = arith.constant 0 : index
    %c49 = arith.constant 49 : index
    %c0_23 = arith.constant 0 : index
    %14 = vector.load %arg2[%c0_21, %c0_22, %c49, %c0_23] : memref<1x1x456x8xbf16, #tpu.memory_space<vmem>>, vector<1x1x384x8xbf16>
    %15 = vector.shape_cast %14 : vector<1x1x384x8xbf16> to vector<384x8xbf16>
    %c0_24 = arith.constant 0 : index
    %c0_25 = arith.constant 0 : index
    %c50 = arith.constant 50 : index
    %c0_26 = arith.constant 0 : index
    %16 = vector.load %arg2[%c0_24, %c0_25, %c50, %c0_26] : memref<1x1x456x8xbf16, #tpu.memory_space<vmem>>, vector<1x1x384x8xbf16>
    %17 = vector.shape_cast %16 : vector<1x1x384x8xbf16> to vector<384x8xbf16>
    %cst = arith.constant 0.000000e+00 : bf16
    %18 = vector.broadcast %cst : bf16 to vector<384x56xbf16>
    %19 = tpu.concatenate %1, %3, %5, %7, %9, %11, %13, %15, %17, %18 in 1 : vector<384x8xbf16>, vector<384x8xbf16>, vector<384x8xbf16>, vector<384x8xbf16>, vector<384x8xbf16>, vector<384x8xbf16>, vector<384x8xbf16>, vector<384x8xbf16>, vector<384x8xbf16>, vector<384x56xbf16> -> vector<384x128xbf16>
    %c0_27 = arith.constant 0 : index
    %c0_28 = arith.constant 0 : index
    %20 = vector.load %arg3[%c0_27, %c0_28] : memref<128x128xbf16, #tpu.memory_space<vmem>>, vector<128x128xbf16>
    %cst_29 = arith.constant dense<0.000000e+00> : vector<384x128xf32>
    %21 = tpu.matmul %19, %20, %cst_29 {dimension_numbers = #tpu.dot_dimension_numbers<[1], [0], [0], [1], [0, 0, 1, 1], [], []>} : vector<384x128xbf16>, vector<128x128xbf16>, vector<384x128xf32> -> vector<384x128xf32>
    %c0_30 = arith.constant 0 : index
    %c0_31 = arith.constant 0 : index
    %22 = vector.load %arg4[%c0_30, %c0_31] : memref<1x128xf32, #tpu.memory_space<vmem>>, vector<1x128xf32>
    %23 = vector.broadcast %22 : vector<1x128xf32> to vector<384x128xf32>
    %24 = arith.addf %21, %23 : vector<384x128xf32>
    %cst_32 = arith.constant 0.000000e+00 : f32
    %25 = vector.broadcast %cst_32 : f32 to vector<384x128xf32>
    %26 = arith.cmpf ogt, %24, %25 : vector<384x128xf32>
    %c0_33 = arith.constant 0 : index
    %c0_34 = arith.constant 0 : index
    %27 = vector.load %arg5[%c0_33, %c0_34] : memref<1x128xf32, #tpu.memory_space<vmem>>, vector<1x128xf32>
    %28 = vector.broadcast %27 : vector<1x128xf32> to vector<384x128xf32>
    %29 = arith.mulf %28, %24 : vector<384x128xf32>
    %30 = arith.select %26, %24, %29 : vector<384x128xi1>, vector<384x128xf32>
    %31 = vector.shape_cast %30 : vector<384x128xf32> to vector<16x24x128xf32>
    %32 = vector.extract_strided_slice %31 {offsets = [0, 0, 0], sizes = [16, 16, 128], strides = [1, 1, 1]} : vector<16x24x128xf32> to vector<16x16x128xf32>
    %c0_35 = arith.constant 0 : index
    %c0_36 = arith.constant 0 : index
    %c0_37 = arith.constant 0 : index
    %c0_38 = arith.constant 0 : index
    %33 = vector.load %arg6[%c0_35, %c0_36, %c0_37, %c0_38] : memref<1x16x16x128xf32, #tpu.memory_space<vmem>>, vector<1x16x16x128xf32>
    %34 = vector.shape_cast %33 : vector<1x16x16x128xf32> to vector<16x16x128xf32>
    %35 = vector.shape_cast %32 : vector<16x16x128xf32> to vector<1x16x16x128xf32>
    tpu.vector_store %arg6[%c0_35, %c0_36, %c0_37, %c0_38], %35 {strides = array<i32>} : memref<1x16x16x128xf32, #tpu.memory_space<vmem>>, vector<1x16x16x128xf32>,
    return
  }
  func.func @transform_0(%arg0: i32, %arg1: i32) -> (i32, i32, i32, i32) {
    %c0_i32 = arith.constant 0 : i32
    %c0_i32_0 = arith.constant 0 : i32
    %c0_i32_1 = arith.constant 0 : i32
    return %arg0, %arg1, %c0_i32, %c0_i32_0 : i32, i32, i32, i32
  }
  func.func @transform_1(%arg0: i32, %arg1: i32) -> (i32, i32) {
    %c0_i32 = arith.constant 0 : i32
    %c0_i32_0 = arith.constant 0 : i32
    %c0_i32_1 = arith.constant 0 : i32
    return %c0_i32, %c0_i32_0 : i32, i32
  }
  func.func @transform_2(%arg0: i32, %arg1: i32) -> (i32, i32) {
    %c0_i32 = arith.constant 0 : i32
    %c0_i32_0 = arith.constant 0 : i32
    %c0_i32_1 = arith.constant 0 : i32
    return %c0_i32, %c0_i32_0 : i32, i32
  }
  func.func @transform_3(%arg0: i32, %arg1: i32) -> (i32, i32) {
    %c0_i32 = arith.constant 0 : i32
    %c0_i32_0 = arith.constant 0 : i32
    %c0_i32_1 = arith.constant 0 : i32
    return %c0_i32, %c0_i32_0 : i32, i32
  }
  func.func @transform_4(%arg0: i32, %arg1: i32) -> (i32, i32, i32, i32) {
    %c0_i32 = arith.constant 0 : i32
    %c0_i32_0 = arith.constant 0 : i32
    %c0_i32_1 = arith.constant 0 : i32
    return %arg0, %arg1, %c0_i32, %c0_i32_0 : i32, i32, i32, i32
  }
}

</mosaic_0001>

<llo_original>
// kernel: pz_conv2d_forward.1
$region0: #{pz_conv2d_forward.1}
  #allocation0 [shape = 'u32[]', space=smem, size = 0x4, offset = 0x4, fixed_abs, tag = 'smem constant byte address 0x4 - core index']
  #allocation1 [shape = 'u32[72,128]{1,0:T(1,128)}', space=vmem, size = 0x9000, scoped, tag = 'internal scratch']
  %s0 = inlined_call_operand.vmem [shape: bf16[2,1,456,8], index: 0, kind: input, shape index: {}]
  %s1 = inlined_call_operand.vmem [shape: bf16[128,128], index: 1, kind: input, shape index: {}]
  %s2 = inlined_call_operand.vmem [shape: f32[1,128], index: 2, kind: input, shape index: {}]
  %s3 = inlined_call_operand.vmem [shape: f32[1,128], index: 3, kind: input, shape index: {}]
  %s4 = inlined_call_operand.vmem [shape: f32[2,16,16,128], index: 4, kind: output, shape index: {}]
  %s5 = sld [smem:[#allocation0]]
  $region49: #{pz_conv2d_forward.1} parent=0
    _
  %s7 = ssub.s32 1, %s5
  %s8 = scalar_select 0, %s7, %s5
  loop: start=0, step=1, limit=4
  $region2: #{pz_conv2d_forward.1} parent=0 // loop_pre_header
    _
  $region3: #{pz_conv2d_forward.1} parent=0 // loop_header
    %s10 = sphi 0, %s14
    %p11 = scmp.ge.s32.totalorder %s10, 4
    %s17 = sphi 0, %s29
    %s18 = sphi 0, %s25
    %s19 = sphi 0, %s17
    %s20 = sphi 0, %s18
    %s21 = sphi 0, %s19
    %s22 = sphi 0, %s20
    %s34 = sphi 0, %s36
    %s37 = sphi 0, %s34
    %s38 = sphi 0, %s37
    %s54 = sphi 0, %s38
    %s58 = sphi 0, %s58
    %s60 = sphi 0, %s58
    %s61 = sphi 0, %s60
    %s75 = sphi 0, %s61
    %s79 = sphi 0, %s79
    %s81 = sphi 0, %s79
    %s82 = sphi 0, %s81
    %s96 = sphi 0, %s82
    %s100 = sphi 0, %s100
    %s102 = sphi 0, %s100
    %s103 = sphi 0, %s102
    %s117 = sphi 0, %s103
    %s125 = sphi 0, %s127
    %s128 = sphi 0, %s125
    %s129 = sphi 0, %s128
    %s145 = sphi 0, %s129
  $region4: #{pz_conv2d_forward.1} parent=0 // loop_header_branch
    %13 = sbr.rel (%p11) target = $region8
  $region5: #{pz_conv2d_forward.1} parent=0 // loop_body
    %s15 = ssub.s32 %s10, 1
    %s16 = ssub.s32 %s10, 2
    %s23 = sadd.s32 1, %s18
    %p24 = scmp.ge.s32.totalorder %s23, 1
    %s25 = scalar_select %p24, 0, %s23
    %s26 = sadd.s32 1, %s17
    %s27 = scalar_select %p24, %s26, %s17
    %p28 = scmp.ge.s32.totalorder %s27, 2
    %s29 = scalar_select %p28, 0, %s27
    %s30 = ssub.s32 %s17, %s29
    %s31 = ssub.s32 %s18, %s25
    %s32 = sor.u32 %s30, %s31
    %p33 = scmp.eq.s32.totalorder %s32, 0
    %s35 = sadd.s32 %s34, 1
    %s36 = scalar_select %p33, %s34, %s35
    %p39 = pneg %p33
    %p40 = scmp.eq.s32.totalorder %s10, 1
    %p41 = por %p39, %p40
    %p42 = scmp.ne.s32.totalorder %s34, %s37
    %p43 = scmp.eq.s32.totalorder %s10, 0
    %p44 = por %p42, %p43
    %p45 = scmp.ne.s32.totalorder %s34, %s37
    %p46 = scmp.eq.s32.totalorder %s15, 1
    %p47 = por %p45, %p46
    %p48 = scmp.ne.s32.totalorder %s37, %s38
    %p49 = scmp.eq.s32.totalorder %s15, 0
    %p50 = por %p48, %p49
    %p51 = scmp.ne.s32.totalorder %s37, %s38
    %p52 = scmp.eq.s32.totalorder %s16, 1
    %p53 = por %p51, %p52
    %p55 = scmp.ne.s32.totalorder %s38, %s54
    %p56 = scmp.eq.s32.totalorder %s16, 0
    %p57 = por %p55, %p56
    %s59 = sadd.s32 %s58, 1
    %p62 = scmp.eq.s32.totalorder %s10, 1
    %p63 = scmp.ne.s32.totalorder %s58, %s60
    %p64 = scmp.eq.s32.totalorder %s10, 0
    %p65 = por %p63, %p64
    %p66 = scmp.ne.s32.totalorder %s58, %s60
    %p67 = scmp.eq.s32.totalorder %s15, 1
    %p68 = por %p66, %p67
    %p69 = scmp.ne.s32.totalorder %s60, %s61
    %p70 = scmp.eq.s32.totalorder %s15, 0
    %p71 = por %p69, %p70
    %p72 = scmp.ne.s32.totalorder %s60, %s61
    %p73 = scmp.eq.s32.totalorder %s16, 1
    %p74 = por %p72, %p73
    %p76 = scmp.ne.s32.totalorder %s61, %s75
    %p77 = scmp.eq.s32.totalorder %s16, 0
    %p78 = por %p76, %p77
    %s80 = sadd.s32 %s79, 1
    %p83 = scmp.eq.s32.totalorder %s10, 1
    %p84 = scmp.ne.s32.totalorder %s79, %s81
    %p85 = scmp.eq.s32.totalorder %s10, 0
    %p86 = por %p84, %p85
    %p87 = scmp.ne.s32.totalorder %s79, %s81
    %p88 = scmp.eq.s32.totalorder %s15, 1
    %p89 = por %p87, %p88
    %p90 = scmp.ne.s32.totalorder %s81, %s82
    %p91 = scmp.eq.s32.totalorder %s15, 0
    %p92 = por %p90, %p91
    %p93 = scmp.ne.s32.totalorder %s81, %s82
    %p94 = scmp.eq.s32.totalorder %s16, 1
    %p95 = por %p93, %p94
    %p97 = scmp.ne.s32.totalorder %s82, %s96
    %p98 = scmp.eq.s32.totalorder %s16, 0
    %p99 = por %p97, %p98
    %s101 = sadd.s32 %s100, 1
    %p104 = scmp.eq.s32.totalorder %s10, 1
    %p105 = scmp.ne.s32.totalorder %s100, %s102
    %p106 = scmp.eq.s32.totalorder %s10, 0
    %p107 = por %p105, %p106
    %p108 = scmp.ne.s32.totalorder %s100, %s102
    %p109 = scmp.eq.s32.totalorder %s15, 1
    %p110 = por %p108, %p109
    %p111 = scmp.ne.s32.totalorder %s102, %s103
    %p112 = scmp.eq.s32.totalorder %s15, 0
    %p113 = por %p111, %p112
    %p114 = scmp.ne.s32.totalorder %s102, %s103
    %p115 = scmp.eq.s32.totalorder %s16, 1
    %p116 = por %p114, %p115
    %p118 = scmp.ne.s32.totalorder %s103, %s117
    %p119 = scmp.eq.s32.totalorder %s16, 0
    %p120 = por %p118, %p119
    %s121 = ssub.s32 %s17, %s29
    %s122 = ssub.s32 %s18, %s25
    %s123 = sor.u32 %s121, %s122
    %p124 = scmp.eq.s32.totalorder %s123, 0
    %s126 = sadd.s32 %s125, 1
    %s127 = scalar_select %p124, %s125, %s126
    %p130 = pneg %p124
    %p131 = scmp.eq.s32.totalorder %s10, 1
    %p132 = por %p130, %p131
    %p133 = scmp.ne.s32.totalorder %s125, %s128
    %p134 = scmp.eq.s32.totalorder %s10, 0
    %p135 = por %p133, %p134
    %p136 = scmp.ne.s32.totalorder %s125, %s128
    %p137 = scmp.eq.s32.totalorder %s15, 1
    %p138 = por %p136, %p137
    %p139 = scmp.ne.s32.totalorder %s128, %s129
    %p140 = scmp.eq.s32.totalorder %s15, 0
    %p141 = por %p139, %p140
    %p142 = scmp.ne.s32.totalorder %s128, %s129
    %p143 = scmp.eq.s32.totalorder %s16, 1
    %p144 = por %p142, %p143
    %p146 = scmp.ne.s32.totalorder %s129, %s145
    %p147 = scmp.eq.s32.totalorder %s16, 0
    %p148 = por %p146, %p147
    %p149 = scmp.le.s32.totalorder 1, %s10
    %p150 = scmp.lt.s32.totalorder %s10, 3
    %p151 = pnand %p149, %p150
    %p152 = pneg %p151
    // Predicated region
    $region9: #{pz_conv2d_forward.1} parent=5 // pred_check
      _
    $region10: #{pz_conv2d_forward.1} parent=5 // pred_check_branch
      %154 = sbr.rel (%p151) target = $region12
    $region11: #{pz_conv2d_forward.1} parent=5 // pred_region
      %s155 = ssub.s32 %s10, 1
      // Predicated region
      $region13: #{pz_conv2d_forward.1} parent=11 // pred_check
        %p156 = pneg %p71
      $region14: #{pz_conv2d_forward.1} parent=11 // pred_check_branch
        %158 = sbr.rel (%p156) target = $region16
      $region15: #{pz_conv2d_forward.1} parent=11 // pred_region
        _
      $region16: #{pz_conv2d_forward.1} parent=11 // pred_fallthru
        _
      // Predicated region
      $region17: #{pz_conv2d_forward.1} parent=11 // pred_check
        %p159 = pneg %p92
      $region18: #{pz_conv2d_forward.1} parent=11 // pred_check_branch
        %161 = sbr.rel (%p159) target = $region20
      $region19: #{pz_conv2d_forward.1} parent=11 // pred_region
        _
      $region20: #{pz_conv2d_forward.1} parent=11 // pred_fallthru
        _
      // Predicated region
      $region21: #{pz_conv2d_forward.1} parent=11 // pred_check
        %p162 = pneg %p113
      $region22: #{pz_conv2d_forward.1} parent=11 // pred_check_branch
        %164 = sbr.rel (%p162) target = $region24
      $region23: #{pz_conv2d_forward.1} parent=11 // pred_region
        _
      $region24: #{pz_conv2d_forward.1} parent=11 // pred_fallthru
        _
    $region12: #{pz_conv2d_forward.1} parent=5 // pred_fallthru
      _
    %p165 = scmp.lt.s32.totalorder %s10, 2
    // Predicated region
    $region25: #{pz_conv2d_forward.1} parent=5 // pred_check
      %p166 = pneg %p165
    $region26: #{pz_conv2d_forward.1} parent=5 // pred_check_branch
      %168 = sbr.rel (%p166) target = $region28
    $region27: #{pz_conv2d_forward.1} parent=5 // pred_region
      // Predicated region
      $region29: #{pz_conv2d_forward.1} parent=27 // pred_check
        %p169 = pneg %p44
      $region30: #{pz_conv2d_forward.1} parent=27 // pred_check_branch
        %171 = sbr.rel (%p169) target = $region32
      $region31: #{pz_conv2d_forward.1} parent=27 // pred_region
        %p172 = scmp.lt.s32.totalorder %s17, 1
        %s173 = scalar_select %p172, %s17, 1
        %p174 = scmp.lt.s32.totalorder %s18, 0
        %s175 = scalar_select %p174, %s18, 0
        %s176 = smul.addr %s175, 57
        %s177 = smul.addr %s173, 57
        %s178 = sadd.s32 %s176, %s177
        %s179 = smul.addr %s178, 4
        %s180 = scalar_lea.vmem %s0, %s179
      $region32: #{pz_conv2d_forward.1} parent=27 // pred_fallthru
        _
    $region28: #{pz_conv2d_forward.1} parent=5 // pred_fallthru
      _
    %p181 = scmp.le.s32.totalorder 1, %s10
    %p182 = scmp.lt.s32.totalorder %s10, 3
    %p183 = pnand %p181, %p182
    %p184 = pneg %p183
    // Predicated region
    $region33: #{pz_conv2d_forward.1} parent=5 // pred_check
      _
    $region34: #{pz_conv2d_forward.1} parent=5 // pred_check_branch
      %186 = sbr.rel (%p183) target = $region36
    $region35: #{pz_conv2d_forward.1} parent=5 // pred_region
      %s187 = ssub.s32 %s10, 1
      %p188 = scmp.lt.s32.totalorder %s19, 1
      %s189 = scalar_select %p188, %s19, 1
      %p190 = scmp.lt.s32.totalorder %s20, 0
      %s191 = scalar_select %p190, %s20, 0
      %s192 = smul.addr %s191, 57
      %s193 = smul.addr %s189, 57
      %s194 = sadd.s32 %s192, %s193
      %s195 = smul.addr %s194, 4
      %s196 = scalar_lea.vmem %s0, %s195
      %p197 = pneg %p50
      %p198 = pneg %p47
      %p199 = pneg %p71
      %p200 = pneg %p68
      %p201 = pneg %p92
      %p202 = pneg %p89
      %p203 = pneg %p113
      %p204 = pneg %p110
      %p205 = pneg %p141
      %p206 = pneg %p138
      %s207 = smul.u32 16, %s20
      %p208 = scmp.lt.s32.totalorder %s19, 1
      %s209 = scalar_select %p208, %s19, 1
      %p210 = scmp.lt.s32.totalorder %s207, 15
      %s211 = scalar_select %p210, %s207, 15
      %s212 = smul.addr %s211, 2
      %s213 = smul.addr %s209, 32
      %s214 = sadd.s32 %s212, %s213
      %s215 = smul.addr %s214, 8
      %s216 = scalar_lea.vmem %s4, %s215
      %p217 = scmp.lt.s32.totalorder %s19, 1
      %s218 = scalar_select %p217, %s19, 1
      %p219 = scmp.lt.s32.totalorder %s20, 0
      %s220 = scalar_select %p219, %s20, 0
      %s221 = smul.addr %s220, 57
      %s222 = smul.addr %s218, 57
      %s223 = sadd.s32 %s221, %s222
      %s224 = smul.addr %s223, 4
      %s225 = scalar_lea.vmem %s0, %s224
      %s226 = smul.u32 16, %s20
      %p227 = scmp.lt.s32.totalorder %s19, 1
      %s228 = scalar_select %p227, %s19, 1
      %p229 = scmp.lt.s32.totalorder %s226, 15
      %s230 = scalar_select %p229, %s226, 15
      %s231 = smul.addr %s230, 2
      %s232 = smul.addr %s228, 32
      %s233 = sadd.s32 %s231, %s232
      %s234 = smul.addr %s233, 8
      %s235 = scalar_lea.vmem %s4, %s234
      %s236 = smul.u32 16, %s20
      %v238 = vld [vmem:[%s225] sm:$0xf]
      %v239 = vld [vmem:[%s225 + $0x4] sm:$0xf]
      %v240 = vld [vmem:[%s225 + $0x8] sm:$0xf]
      %v241 = vld [vmem:[%s225 + $0xc] sm:$0xf]
      %v242 = vld [vmem:[%s225 + $0x10] sm:$0xf]
      %v243 = vld [vmem:[%s225 + $0x14] sm:$0xf]
      %v244 = vld [vmem:[%s225 + $0x18] sm:$0xf]
      %v245 = vld [vmem:[%s225 + $0x1c] sm:$0xf]
      %v246 = vld [vmem:[%s225 + $0x20] sm:$0xf]
      %v247 = vld [vmem:[%s225 + $0x24] sm:$0xf]
      %v248 = vld [vmem:[%s225 + $0x28] sm:$0xf]
      %v249 = vld [vmem:[%s225 + $0x2c] sm:$0xf]
      %v250 = vld [vmem:[%s225 + $0x30] sm:$0xf]
      %v251 = vld [vmem:[%s225 + $0x34] sm:$0xf]
      %v252 = vld [vmem:[%s225 + $0x38] sm:$0xf]
      %v253 = vld [vmem:[%s225 + $0x3c] sm:$0xf]
      %v254 = vld [vmem:[%s225 + $0x40] sm:$0xf]
      %v255 = vld [vmem:[%s225 + $0x44] sm:$0xf]
      %v256 = vld [vmem:[%s225 + $0x48] sm:$0xf]
      %v257 = vld [vmem:[%s225 + $0x4c] sm:$0xf]
      %v258 = vld [vmem:[%s225 + $0x50] sm:$0xf]
      %v259 = vld [vmem:[%s225 + $0x54] sm:$0xf]
      %v260 = vld [vmem:[%s225 + $0x58] sm:$0xf]
      %v261 = vld [vmem:[%s225 + $0x5c] sm:$0xf]
      %v262 = vld [vmem:[%s225 + $0x60] sm:$0xf]
      %v263 = vld [vmem:[%s225 + $0x64] sm:$0xf]
      %v264 = vld [vmem:[%s225 + $0x68] sm:$0xf]
      %v265 = vld [vmem:[%s225 + $0x6c] sm:$0xf]
      %v266 = vld [vmem:[%s225 + $0x70] sm:$0xf]
      %v267 = vld [vmem:[%s225 + $0x74] sm:$0xf]
      %v268 = vld [vmem:[%s225 + $0x78] sm:$0xf]
      %v269 = vld [vmem:[%s225 + $0x7c] sm:$0xf]
      %v270 = vld [vmem:[%s225 + $0x80] sm:$0xf]
      %v271 = vld [vmem:[%s225 + $0x84] sm:$0xf]
      %v272 = vld [vmem:[%s225 + $0x88] sm:$0xf]
      %v273 = vld [vmem:[%s225 + $0x8c] sm:$0xf]
      %v274 = vld [vmem:[%s225 + $0x90] sm:$0xf]
      %v275 = vld [vmem:[%s225 + $0x94] sm:$0xf]
      %v276 = vld [vmem:[%s225 + $0x98] sm:$0xf]
      %v277 = vld [vmem:[%s225 + $0x9c] sm:$0xf]
      %v278 = vld [vmem:[%s225 + $0xa0] sm:$0xf]
      %v279 = vld [vmem:[%s225 + $0xa4] sm:$0xf]
      %v280 = vld [vmem:[%s225 + $0xa8] sm:$0xf]
      %v281 = vld [vmem:[%s225 + $0xac] sm:$0xf]
      %v282 = vld [vmem:[%s225 + $0xb0] sm:$0xf]
      %v283 = vld [vmem:[%s225 + $0xb4] sm:$0xf]
      %v284 = vld [vmem:[%s225 + $0xb8] sm:$0xf]
      %v285 = vld [vmem:[%s225 + $0xbc] sm:$0xf]
      %v286 = vld [vmem:[%s225 + $0xc0] sm:$0x1]
      %v287 = vld [vmem:[%s225] sm:$0xe]
      %v288 = vld [vmem:[%s225 + $0xc0] sm:$0xf]
      %v289 = vld [vmem:[%s225 + $0xc4] sm:$0xf]
      %v290 = vld [vmem:[%s225 + $0xc8] sm:$0xf]
      %v291 = vld [vmem:[%s225 + $0xcc] sm:$0x1]
      %v292 = vld [vmem:[%s225 + $0xc] sm:$0xe]
      %v293 = vld [vmem:[%s225 + $0xcc] sm:$0xf]
      %v294 = vld [vmem:[%s225 + $0xd0] sm:$0xf]
      %v295 = vld [vmem:[%s225 + $0xd4] sm:$0xf]
      %v296 = vld [vmem:[%s225 + $0xd8] sm:$0x1]
      %v297 = vld [vmem:[%s225 + $0x18] sm:$0xe]
      %v346 = vunpack.c.l.b16 %v238
      %v347 = vunpack.c.l.b16 %v239
      %v348 = vunpack.c.l.b16 %v240
      %v349 = vunpack.c.l.b16 %v241
      %v350 = vunpack.c.l.b16 %v242
      %v351 = vunpack.c.l.b16 %v243
      %v352 = vunpack.c.l.b16 %v244
      %v353 = vunpack.c.l.b16 %v245
      %v354 = vunpack.c.l.b16 %v246
      %v355 = vunpack.c.l.b16 %v247
      %v356 = vunpack.c.l.b16 %v248
      %v357 = vunpack.c.l.b16 %v249
      %v358 = vunpack.c.l.b16 %v250
      %v359 = vunpack.c.l.b16 %v251
      %v360 = vunpack.c.l.b16 %v252
      %v361 = vunpack.c.l.b16 %v253
      %v362 = vunpack.c.l.b16 %v254
      %v363 = vunpack.c.l.b16 %v255
      %v364 = vunpack.c.l.b16 %v256
      %v365 = vunpack.c.l.b16 %v257
      %v366 = vunpack.c.l.b16 %v258
      %v367 = vunpack.c.l.b16 %v259
      %v368 = vunpack.c.l.b16 %v260
      %v369 = vunpack.c.l.b16 %v261
      %v370 = vunpack.c.l.b16 %v262
      %v371 = vunpack.c.l.b16 %v263
      %v372 = vunpack.c.l.b16 %v264
      %v373 = vunpack.c.l.b16 %v265
      %v374 = vunpack.c.l.b16 %v266
      %v375 = vunpack.c.l.b16 %v267
      %v376 = vunpack.c.l.b16 %v268
      %v377 = vunpack.c.l.b16 %v269
      %v378 = vunpack.c.l.b16 %v270
      %v379 = vunpack.c.l.b16 %v271
      %v380 = vunpack.c.l.b16 %v272
      %v381 = vunpack.c.l.b16 %v273
      %v382 = vunpack.c.l.b16 %v274
      %v383 = vunpack.c.l.b16 %v275
      %v384 = vunpack.c.l.b16 %v276
      %v385 = vunpack.c.l.b16 %v277
      %v386 = vunpack.c.l.b16 %v278
      %v387 = vunpack.c.l.b16 %v279
      %v388 = vunpack.c.l.b16 %v280
      %v389 = vunpack.c.l.b16 %v281
      %v390 = vunpack.c.l.b16 %v282
      %v391 = vunpack.c.l.b16 %v283
      %v392 = vunpack.c.l.b16 %v284
      %v393 = vunpack.c.l.b16 %v285
      %v394 = vpack.c.b16 %v347, %v346
      %v395 = vpack.c.b16 %v349, %v348
      %v396 = vpack.c.b16 %v351, %v350
      %v397 = vpack.c.b16 %v353, %v352
      %v398 = vpack.c.b16 %v355, %v354
      %v399 = vpack.c.b16 %v357, %v356
      %v400 = vpack.c.b16 %v359, %v358
      %v401 = vpack.c.b16 %v361, %v360
      %v402 = vpack.c.b16 %v363, %v362
      %v403 = vpack.c.b16 %v365, %v364
      %v404 = vpack.c.b16 %v367, %v366
      %v405 = vpack.c.b16 %v369, %v368
      %v406 = vpack.c.b16 %v371, %v370
      %v407 = vpack.c.b16 %v373, %v372
      %v408 = vpack.c.b16 %v375, %v374
      %v409 = vpack.c.b16 %v377, %v376
      %v410 = vpack.c.b16 %v379, %v378
      %v411 = vpack.c.b16 %v381, %v380
      %v412 = vpack.c.b16 %v383, %v382
      %v413 = vpack.c.b16 %v385, %v384
      %v414 = vpack.c.b16 %v387, %v386
      %v415 = vpack.c.b16 %v389, %v388
      %v416 = vpack.c.b16 %v391, %v390
      %v417 = vpack.c.b16 %v393, %v392
      %v419 = vunpack.c.l.b16 %v286
      %v420 = vpack.c.b16 %v419, %v419
      %vm421 = vsmask.f32 7424
      %v423 = vshrl.u32 %v394, 16
      %v425 = vshll.u32 %v394, 16
      %v427 = vrot.slane %v425, 1
      %v428 = vor.u32 %v423, %v427
      %v430 = vshll.u32 %v395, 16
      %v432 = vrot.slane %v430, 1
      %v433 = vsel %vm421, %v428, %v432
      %v434 = vshrl.u32 %v395, 16
      %v436 = vor.u32 %v434, %v432
      %v438 = vshll.u32 %v396, 16
      %v440 = vrot.slane %v438, 1
      %v441 = vsel %vm421, %v436, %v440
      %v442 = vshrl.u32 %v396, 16
      %v444 = vor.u32 %v442, %v440
      %v446 = vshll.u32 %v397, 16
      %v448 = vrot.slane %v446, 1
      %v449 = vsel %vm421, %v444, %v448
      %v450 = vshrl.u32 %v397, 16
      %v452 = vor.u32 %v450, %v448
      %v454 = vshll.u32 %v398, 16
      %v456 = vrot.slane %v454, 1
      %v457 = vsel %vm421, %v452, %v456
      %v458 = vshrl.u32 %v398, 16
      %v460 = vor.u32 %v458, %v456
      %v462 = vshll.u32 %v399, 16
      %v464 = vrot.slane %v462, 1
      %v465 = vsel %vm421, %v460, %v464
      %v466 = vshrl.u32 %v399, 16
      %v468 = vor.u32 %v466, %v464
      %v470 = vshll.u32 %v400, 16
      %v472 = vrot.slane %v470, 1
      %v473 = vsel %vm421, %v468, %v472
      %v474 = vshrl.u32 %v400, 16
      %v476 = vor.u32 %v474, %v472
      %v478 = vshll.u32 %v401, 16
      %v480 = vrot.slane %v478, 1
      %v481 = vsel %vm421, %v476, %v480
      %v482 = vshrl.u32 %v401, 16
      %v484 = vor.u32 %v482, %v480
      %v486 = vshll.u32 %v402, 16
      %v488 = vrot.slane %v486, 1
      %v489 = vsel %vm421, %v484, %v488
      %v490 = vshrl.u32 %v402, 16
      %v492 = vor.u32 %v490, %v488
      %v494 = vshll.u32 %v403, 16
      %v496 = vrot.slane %v494, 1
      %v497 = vsel %vm421, %v492, %v496
      %v498 = vshrl.u32 %v403, 16
      %v500 = vor.u32 %v498, %v496
      %v502 = vshll.u32 %v404, 16
      %v504 = vrot.slane %v502, 1
      %v505 = vsel %vm421, %v500, %v504
      %v506 = vshrl.u32 %v404, 16
      %v508 = vor.u32 %v506, %v504
      %v510 = vshll.u32 %v405, 16
      %v512 = vrot.slane %v510, 1
      %v513 = vsel %vm421, %v508, %v512
      %v514 = vshrl.u32 %v405, 16
      %v516 = vor.u32 %v514, %v512
      %v518 = vshll.u32 %v406, 16
      %v520 = vrot.slane %v518, 1
      %v521 = vsel %vm421, %v516, %v520
      %v522 = vshrl.u32 %v406, 16
      %v524 = vor.u32 %v522, %v520
      %v526 = vshll.u32 %v407, 16
      %v528 = vrot.slane %v526, 1
      %v529 = vsel %vm421, %v524, %v528
      %v530 = vshrl.u32 %v407, 16
      %v532 = vor.u32 %v530, %v528
      %v534 = vshll.u32 %v408, 16
      %v536 = vrot.slane %v534, 1
      %v537 = vsel %vm421, %v532, %v536
      %v538 = vshrl.u32 %v408, 16
      %v540 = vor.u32 %v538, %v536
      %v542 = vshll.u32 %v409, 16
      %v544 = vrot.slane %v542, 1
      %v545 = vsel %vm421, %v540, %v544
      %v546 = vshrl.u32 %v409, 16
      %v548 = vor.u32 %v546, %v544
      %v550 = vshll.u32 %v410, 16
      %v552 = vrot.slane %v550, 1
      %v553 = vsel %vm421, %v548, %v552
      %v554 = vshrl.u32 %v410, 16
      %v556 = vor.u32 %v554, %v552
      %v558 = vshll.u32 %v411, 16
      %v560 = vrot.slane %v558, 1
      %v561 = vsel %vm421, %v556, %v560
      %v562 = vshrl.u32 %v411, 16
      %v564 = vor.u32 %v562, %v560
      %v566 = vshll.u32 %v412, 16
      %v568 = vrot.slane %v566, 1
      %v569 = vsel %vm421, %v564, %v568
      %v570 = vshrl.u32 %v412, 16
      %v572 = vor.u32 %v570, %v568
      %v574 = vshll.u32 %v413, 16
      %v576 = vrot.slane %v574, 1
      %v577 = vsel %vm421, %v572, %v576
      %v578 = vshrl.u32 %v413, 16
      %v580 = vor.u32 %v578, %v576
      %v582 = vshll.u32 %v414, 16
      %v584 = vrot.slane %v582, 1
      %v585 = vsel %vm421, %v580, %v584
      %v586 = vshrl.u32 %v414, 16
      %v588 = vor.u32 %v586, %v584
      %v590 = vshll.u32 %v415, 16
      %v592 = vrot.slane %v590, 1
      %v593 = vsel %vm421, %v588, %v592
      %v594 = vshrl.u32 %v415, 16
      %v596 = vor.u32 %v594, %v592
      %v598 = vshll.u32 %v416, 16
      %v600 = vrot.slane %v598, 1
      %v601 = vsel %vm421, %v596, %v600
      %v602 = vshrl.u32 %v416, 16
      %v604 = vor.u32 %v602, %v600
      %v606 = vshll.u32 %v417, 16
      %v608 = vrot.slane %v606, 1
      %v609 = vsel %vm421, %v604, %v608
      %v610 = vshrl.u32 %v417, 16
      %v612 = vor.u32 %v610, %v608
      %v614 = vshll.u32 %v420, 16
      %v616 = vrot.slane %v614, 1
      %v617 = vsel %vm421, %v612, %v616
      %618 = vrot.lane.b32.xlu0 %v433, 8
      %v619 = vpop.permute.xlu0 %618
      %620 = vrot.lane.b32.xlu0 %v441, 8
      %v621 = vpop.permute.xlu0 %620
      %622 = vrot.lane.b32.xlu0 %v449, 8
      %v623 = vpop.permute.xlu0 %622
      %624 = vrot.lane.b32.xlu0 %v457, 8
      %v625 = vpop.permute.xlu0 %624
      %626 = vrot.lane.b32.xlu0 %v465, 8
      %v627 = vpop.permute.xlu0 %626
      %628 = vrot.lane.b32.xlu0 %v473, 8
      %v629 = vpop.permute.xlu0 %628
      %630 = vrot.lane.b32.xlu0 %v481, 8
      %v631 = vpop.permute.xlu0 %630
      %632 = vrot.lane.b32.xlu0 %v489, 8
      %v633 = vpop.permute.xlu0 %632
      %634 = vrot.lane.b32.xlu0 %v497, 8
      %v635 = vpop.permute.xlu0 %634
      %636 = vrot.lane.b32.xlu0 %v505, 8
      %v637 = vpop.permute.xlu0 %636
      %638 = vrot.lane.b32.xlu0 %v513, 8
      %v639 = vpop.permute.xlu0 %638
      %640 = vrot.lane.b32.xlu0 %v521, 8
      %v641 = vpop.permute.xlu0 %640
      %642 = vrot.lane.b32.xlu0 %v529, 8
      %v643 = vpop.permute.xlu0 %642
      %644 = vrot.lane.b32.xlu0 %v537, 8
      %v645 = vpop.permute.xlu0 %644
      %646 = vrot.lane.b32.xlu0 %v545, 8
      %v647 = vpop.permute.xlu0 %646
      %648 = vrot.lane.b32.xlu0 %v553, 8
      %v649 = vpop.permute.xlu0 %648
      %650 = vrot.lane.b32.xlu0 %v561, 8
      %v651 = vpop.permute.xlu0 %650
      %652 = vrot.lane.b32.xlu0 %v569, 8
      %v653 = vpop.permute.xlu0 %652
      %654 = vrot.lane.b32.xlu0 %v577, 8
      %v655 = vpop.permute.xlu0 %654
      %656 = vrot.lane.b32.xlu0 %v585, 8
      %v657 = vpop.permute.xlu0 %656
      %658 = vrot.lane.b32.xlu0 %v593, 8
      %v659 = vpop.permute.xlu0 %658
      %660 = vrot.lane.b32.xlu0 %v601, 8
      %v661 = vpop.permute.xlu0 %660
      %662 = vrot.lane.b32.xlu0 %v609, 8
      %v663 = vpop.permute.xlu0 %662
      %664 = vrot.lane.b32.xlu0 %v617, 8
      %v665 = vpop.permute.xlu0 %664
      %v667 = vunpack.c.l.b16 %v287
      %v668 = vpack.c.b16 %v347, %v667
      %vm669 = vcmask 1046528
      %v670 = vrot.slane %v668, 1
      %v671 = vrot.slane %v395, 1
      %v672 = vsel %vm669, %v670, %v671
      %v673 = vrot.slane %v396, 1
      %v674 = vsel %vm669, %v671, %v673
      %v675 = vrot.slane %v397, 1
      %v676 = vsel %vm669, %v673, %v675
      %v677 = vrot.slane %v398, 1
      %v678 = vsel %vm669, %v675, %v677
      %v679 = vrot.slane %v399, 1
      %v680 = vsel %vm669, %v677, %v679
      %v681 = vrot.slane %v400, 1
      %v682 = vsel %vm669, %v679, %v681
      %v683 = vrot.slane %v401, 1
      %v684 = vsel %vm669, %v681, %v683
      %v685 = vrot.slane %v402, 1
      %v686 = vsel %vm669, %v683, %v685
      %v687 = vrot.slane %v403, 1
      %v688 = vsel %vm669, %v685, %v687
      %v689 = vrot.slane %v404, 1
      %v690 = vsel %vm669, %v687, %v689
      %v691 = vrot.slane %v405, 1
      %v692 = vsel %vm669, %v689, %v691
      %v693 = vrot.slane %v406, 1
      %v694 = vsel %vm669, %v691, %v693
      %v695 = vrot.slane %v407, 1
      %v696 = vsel %vm669, %v693, %v695
      %v697 = vrot.slane %v408, 1
      %v698 = vsel %vm669, %v695, %v697
      %v699 = vrot.slane %v409, 1
      %v700 = vsel %vm669, %v697, %v699
      %v701 = vrot.slane %v410, 1
      %v702 = vsel %vm669, %v699, %v701
      %v703 = vrot.slane %v411, 1
      %v704 = vsel %vm669, %v701, %v703
      %v705 = vrot.slane %v412, 1
      %v706 = vsel %vm669, %v703, %v705
      %v707 = vrot.slane %v413, 1
      %v708 = vsel %vm669, %v705, %v707
      %v709 = vrot.slane %v414, 1
      %v710 = vsel %vm669, %v707, %v709
      %v711 = vrot.slane %v415, 1
      %v712 = vsel %vm669, %v709, %v711
      %v713 = vrot.slane %v416, 1
      %v714 = vsel %vm669, %v711, %v713
      %v715 = vrot.slane %v417, 1
      %v716 = vsel %vm669, %v713, %v715
      %v717 = vrot.slane %v420, 1
      %v718 = vsel %vm669, %v715, %v717
      %719 = vrot.lane.b32.xlu0 %v672, 16
      %v720 = vpop.permute.xlu0 %719
      %721 = vrot.lane.b32.xlu0 %v674, 16
      %v722 = vpop.permute.xlu0 %721
      %723 = vrot.lane.b32.xlu0 %v676, 16
      %v724 = vpop.permute.xlu0 %723
      %725 = vrot.lane.b32.xlu0 %v678, 16
      %v726 = vpop.permute.xlu0 %725
      %727 = vrot.lane.b32.xlu0 %v680, 16
      %v728 = vpop.permute.xlu0 %727
      %729 = vrot.lane.b32.xlu0 %v682, 16
      %v730 = vpop.permute.xlu0 %729
      %731 = vrot.lane.b32.xlu0 %v684, 16
      %v732 = vpop.permute.xlu0 %731
      %733 = vrot.lane.b32.xlu0 %v686, 16
      %v734 = vpop.permute.xlu0 %733
      %735 = vrot.lane.b32.xlu0 %v688, 16
      %v736 = vpop.permute.xlu0 %735
      %737 = vrot.lane.b32.xlu0 %v690, 16
      %v738 = vpop.permute.xlu0 %737
      %739 = vrot.lane.b32.xlu0 %v692, 16
      %v740 = vpop.permute.xlu0 %739
      %741 = vrot.lane.b32.xlu0 %v694, 16
      %v742 = vpop.permute.xlu0 %741
      %743 = vrot.lane.b32.xlu0 %v696, 16
      %v744 = vpop.permute.xlu0 %743
      %745 = vrot.lane.b32.xlu0 %v698, 16
      %v746 = vpop.permute.xlu0 %745
      %747 = vrot.lane.b32.xlu0 %v700, 16
      %v748 = vpop.permute.xlu0 %747
      %749 = vrot.lane.b32.xlu0 %v702, 16
      %v750 = vpop.permute.xlu0 %749
      %751 = vrot.lane.b32.xlu0 %v704, 16
      %v752 = vpop.permute.xlu0 %751
      %753 = vrot.lane.b32.xlu0 %v706, 16
      %v754 = vpop.permute.xlu0 %753
      %755 = vrot.lane.b32.xlu0 %v708, 16
      %v756 = vpop.permute.xlu0 %755
      %757 = vrot.lane.b32.xlu0 %v710, 16
      %v758 = vpop.permute.xlu0 %757
      %759 = vrot.lane.b32.xlu0 %v712, 16
      %v760 = vpop.permute.xlu0 %759
      %761 = vrot.lane.b32.xlu0 %v714, 16
      %v762 = vpop.permute.xlu0 %761
      %763 = vrot.lane.b32.xlu0 %v716, 16
      %v764 = vpop.permute.xlu0 %763
      %765 = vrot.lane.b32.xlu0 %v718, 16
      %v766 = vpop.permute.xlu0 %765
      %v770 = vunpack.c.l.b16 %v288
      %v771 = vunpack.c.l.b16 %v289
      %v772 = vunpack.c.l.b16 %v290
      %v773 = vpack.c.b16 %v350, %v349
      %v774 = vpack.c.b16 %v352, %v351
      %v775 = vpack.c.b16 %v354, %v353
      %v776 = vpack.c.b16 %v356, %v355
      %v777 = vpack.c.b16 %v358, %v357
      %v778 = vpack.c.b16 %v360, %v359
      %v779 = vpack.c.b16 %v362, %v361
      %v780 = vpack.c.b16 %v364, %v363
      %v781 = vpack.c.b16 %v366, %v365
      %v782 = vpack.c.b16 %v368, %v367
      %v783 = vpack.c.b16 %v370, %v369
      %v784 = vpack.c.b16 %v372, %v371
      %v785 = vpack.c.b16 %v374, %v373
      %v786 = vpack.c.b16 %v376, %v375
      %v787 = vpack.c.b16 %v378, %v377
      %v788 = vpack.c.b16 %v380, %v379
      %v789 = vpack.c.b16 %v382, %v381
      %v790 = vpack.c.b16 %v384, %v383
      %v791 = vpack.c.b16 %v386, %v385
      %v792 = vpack.c.b16 %v388, %v387
      %v793 = vpack.c.b16 %v390, %v389
      %v794 = vpack.c.b16 %v392, %v391
      %v795 = vpack.c.b16 %v770, %v393
      %v796 = vpack.c.b16 %v772, %v771
      %797 = vrot.lane.b32.xlu0 %v773, 24
      %v798 = vpop.permute.xlu0 %797
      %799 = vrot.lane.b32.xlu0 %v774, 24
      %v800 = vpop.permute.xlu0 %799
      %801 = vrot.lane.b32.xlu0 %v775, 24
      %v802 = vpop.permute.xlu0 %801
      %803 = vrot.lane.b32.xlu0 %v776, 24
      %v804 = vpop.permute.xlu0 %803
      %805 = vrot.lane.b32.xlu0 %v777, 24
      %v806 = vpop.permute.xlu0 %805
      %807 = vrot.lane.b32.xlu0 %v778, 24
      %v808 = vpop.permute.xlu0 %807
      %809 = vrot.lane.b32.xlu0 %v779, 24
      %v810 = vpop.permute.xlu0 %809
      %811 = vrot.lane.b32.xlu0 %v780, 24
      %v812 = vpop.permute.xlu0 %811
      %813 = vrot.lane.b32.xlu0 %v781, 24
      %v814 = vpop.permute.xlu0 %813
      %815 = vrot.lane.b32.xlu0 %v782, 24
      %v816 = vpop.permute.xlu0 %815
      %817 = vrot.lane.b32.xlu0 %v783, 24
      %v818 = vpop.permute.xlu0 %817
      %819 = vrot.lane.b32.xlu0 %v784, 24
      %v820 = vpop.permute.xlu0 %819
      %821 = vrot.lane.b32.xlu0 %v785, 24
      %v822 = vpop.permute.xlu0 %821
      %823 = vrot.lane.b32.xlu0 %v786, 24
      %v824 = vpop.permute.xlu0 %823
      %825 = vrot.lane.b32.xlu0 %v787, 24
      %v826 = vpop.permute.xlu0 %825
      %827 = vrot.lane.b32.xlu0 %v788, 24
      %v828 = vpop.permute.xlu0 %827
      %829 = vrot.lane.b32.xlu0 %v789, 24
      %v830 = vpop.permute.xlu0 %829
      %831 = vrot.lane.b32.xlu0 %v790, 24
      %v832 = vpop.permute.xlu0 %831
      %833 = vrot.lane.b32.xlu0 %v791, 24
      %v834 = vpop.permute.xlu0 %833
      %835 = vrot.lane.b32.xlu0 %v792, 24
      %v836 = vpop.permute.xlu0 %835
      %837 = vrot.lane.b32.xlu0 %v793, 24
      %v838 = vpop.permute.xlu0 %837
      %839 = vrot.lane.b32.xlu0 %v794, 24
      %v840 = vpop.permute.xlu0 %839
      %841 = vrot.lane.b32.xlu0 %v795, 24
      %v842 = vpop.permute.xlu0 %841
      %843 = vrot.lane.b32.xlu0 %v796, 24
      %v844 = vpop.permute.xlu0 %843
      %v846 = vunpack.c.l.b16 %v291
      %v847 = vpack.c.b16 %v846, %v846
      %v849 = vshrl.u32 %v773, 16
      %v851 = vshll.u32 %v773, 16
      %v853 = vrot.slane %v851, 1
      %v854 = vor.u32 %v849, %v853
      %v856 = vshll.u32 %v774, 16
      %v858 = vrot.slane %v856, 1
      %v859 = vsel %vm421, %v854, %v858
      %v860 = vshrl.u32 %v774, 16
      %v862 = vor.u32 %v860, %v858
      %v864 = vshll.u32 %v775, 16
      %v866 = vrot.slane %v864, 1
      %v867 = vsel %vm421, %v862, %v866
      %v868 = vshrl.u32 %v775, 16
      %v870 = vor.u32 %v868, %v866
      %v872 = vshll.u32 %v776, 16
      %v874 = vrot.slane %v872, 1
      %v875 = vsel %vm421, %v870, %v874
      %v876 = vshrl.u32 %v776, 16
      %v878 = vor.u32 %v876, %v874
      %v880 = vshll.u32 %v777, 16
      %v882 = vrot.slane %v880, 1
      %v883 = vsel %vm421, %v878, %v882
      %v884 = vshrl.u32 %v777, 16
      %v886 = vor.u32 %v884, %v882
      %v888 = vshll.u32 %v778, 16
      %v890 = vrot.slane %v888, 1
      %v891 = vsel %vm421, %v886, %v890
      %v892 = vshrl.u32 %v778, 16
      %v894 = vor.u32 %v892, %v890
      %v896 = vshll.u32 %v779, 16
      %v898 = vrot.slane %v896, 1
      %v899 = vsel %vm421, %v894, %v898
      %v900 = vshrl.u32 %v779, 16
      %v902 = vor.u32 %v900, %v898
      %v904 = vshll.u32 %v780, 16
      %v906 = vrot.slane %v904, 1
      %v907 = vsel %vm421, %v902, %v906
      %v908 = vshrl.u32 %v780, 16
      %v910 = vor.u32 %v908, %v906
      %v912 = vshll.u32 %v781, 16
      %v914 = vrot.slane %v912, 1
      %v915 = vsel %vm421, %v910, %v914
      %v916 = vshrl.u32 %v781, 16
      %v918 = vor.u32 %v916, %v914
      %v920 = vshll.u32 %v782, 16
      %v922 = vrot.slane %v920, 1
      %v923 = vsel %vm421, %v918, %v922
      %v924 = vshrl.u32 %v782, 16
      %v926 = vor.u32 %v924, %v922
      %v928 = vshll.u32 %v783, 16
      %v930 = vrot.slane %v928, 1
      %v931 = vsel %vm421, %v926, %v930
      %v932 = vshrl.u32 %v783, 16
      %v934 = vor.u32 %v932, %v930
      %v936 = vshll.u32 %v784, 16
      %v938 = vrot.slane %v936, 1
      %v939 = vsel %vm421, %v934, %v938
      %v940 = vshrl.u32 %v784, 16
      %v942 = vor.u32 %v940, %v938
      %v944 = vshll.u32 %v785, 16
      %v946 = vrot.slane %v944, 1
      %v947 = vsel %vm421, %v942, %v946
      %v948 = vshrl.u32 %v785, 16
      %v950 = vor.u32 %v948, %v946
      %v952 = vshll.u32 %v786, 16
      %v954 = vrot.slane %v952, 1
      %v955 = vsel %vm421, %v950, %v954
      %v956 = vshrl.u32 %v786, 16
      %v958 = vor.u32 %v956, %v954
      %v960 = vshll.u32 %v787, 16
      %v962 = vrot.slane %v960, 1
      %v963 = vsel %vm421, %v958, %v962
      %v964 = vshrl.u32 %v787, 16
      %v966 = vor.u32 %v964, %v962
      %v968 = vshll.u32 %v788, 16
      %v970 = vrot.slane %v968, 1
      %v971 = vsel %vm421, %v966, %v970
      %v972 = vshrl.u32 %v788, 16
      %v974 = vor.u32 %v972, %v970
      %v976 = vshll.u32 %v789, 16
      %v978 = vrot.slane %v976, 1
      %v979 = vsel %vm421, %v974, %v978
      %v980 = vshrl.u32 %v789, 16
      %v982 = vor.u32 %v980, %v978
      %v984 = vshll.u32 %v790, 16
      %v986 = vrot.slane %v984, 1
      %v987 = vsel %vm421, %v982, %v986
      %v988 = vshrl.u32 %v790, 16
      %v990 = vor.u32 %v988, %v986
      %v992 = vshll.u32 %v791, 16
      %v994 = vrot.slane %v992, 1
      %v995 = vsel %vm421, %v990, %v994
      %v996 = vshrl.u32 %v791, 16
      %v998 = vor.u32 %v996, %v994
      %v1000 = vshll.u32 %v792, 16
      %v1002 = vrot.slane %v1000, 1
      %v1003 = vsel %vm421, %v998, %v1002
      %v1004 = vshrl.u32 %v792, 16
      %v1006 = vor.u32 %v1004, %v1002
      %v1008 = vshll.u32 %v793, 16
      %v1010 = vrot.slane %v1008, 1
      %v1011 = vsel %vm421, %v1006, %v1010
      %v1012 = vshrl.u32 %v793, 16
      %v1014 = vor.u32 %v1012, %v1010
      %v1016 = vshll.u32 %v794, 16
      %v1018 = vrot.slane %v1016, 1
      %v1019 = vsel %vm421, %v1014, %v1018
      %v1020 = vshrl.u32 %v794, 16
      %v1022 = vor.u32 %v1020, %v1018
      %v1024 = vshll.u32 %v795, 16
      %v1026 = vrot.slane %v1024, 1
      %v1027 = vsel %vm421, %v1022, %v1026
      %v1028 = vshrl.u32 %v795, 16
      %v1030 = vor.u32 %v1028, %v1026
      %v1032 = vshll.u32 %v796, 16
      %v1034 = vrot.slane %v1032, 1
      %v1035 = vsel %vm421, %v1030, %v1034
      %v1036 = vshrl.u32 %v796, 16
      %v1038 = vor.u32 %v1036, %v1034
      %v1040 = vshll.u32 %v847, 16
      %v1042 = vrot.slane %v1040, 1
      %v1043 = vsel %vm421, %v1038, %v1042
      %1044 = vrot.lane.b32.xlu0 %v859, 32
      %v1045 = vpop.permute.xlu0 %1044
      %1046 = vrot.lane.b32.xlu0 %v867, 32
      %v1047 = vpop.permute.xlu0 %1046
      %1048 = vrot.lane.b32.xlu0 %v875, 32
      %v1049 = vpop.permute.xlu0 %1048
      %1050 = vrot.lane.b32.xlu0 %v883, 32
      %v1051 = vpop.permute.xlu0 %1050
      %1052 = vrot.lane.b32.xlu0 %v891, 32
      %v1053 = vpop.permute.xlu0 %1052
      %1054 = vrot.lane.b32.xlu0 %v899, 32
      %v1055 = vpop.permute.xlu0 %1054
      %1056 = vrot.lane.b32.xlu0 %v907, 32
      %v1057 = vpop.permute.xlu0 %1056
      %1058 = vrot.lane.b32.xlu0 %v915, 32
      %v1059 = vpop.permute.xlu0 %1058
      %1060 = vrot.lane.b32.xlu0 %v923, 32
      %v1061 = vpop.permute.xlu0 %1060
      %1062 = vrot.lane.b32.xlu0 %v931, 32
      %v1063 = vpop.permute.xlu0 %1062
      %1064 = vrot.lane.b32.xlu0 %v939, 32
      %v1065 = vpop.permute.xlu0 %1064
      %1066 = vrot.lane.b32.xlu0 %v947, 32
      %v1067 = vpop.permute.xlu0 %1066
      %1068 = vrot.lane.b32.xlu0 %v955, 32
      %v1069 = vpop.permute.xlu0 %1068
      %1070 = vrot.lane.b32.xlu0 %v963, 32
      %v1071 = vpop.permute.xlu0 %1070
      %1072 = vrot.lane.b32.xlu0 %v971, 32
      %v1073 = vpop.permute.xlu0 %1072
      %1074 = vrot.lane.b32.xlu0 %v979, 32
      %v1075 = vpop.permute.xlu0 %1074
      %1076 = vrot.lane.b32.xlu0 %v987, 32
      %v1077 = vpop.permute.xlu0 %1076
      %1078 = vrot.lane.b32.xlu0 %v995, 32
      %v1079 = vpop.permute.xlu0 %1078
      %1080 = vrot.lane.b32.xlu0 %v1003, 32
      %v1081 = vpop.permute.xlu0 %1080
      %1082 = vrot.lane.b32.xlu0 %v1011, 32
      %v1083 = vpop.permute.xlu0 %1082
      %1084 = vrot.lane.b32.xlu0 %v1019, 32
      %v1085 = vpop.permute.xlu0 %1084
      %1086 = vrot.lane.b32.xlu0 %v1027, 32
      %v1087 = vpop.permute.xlu0 %1086
      %1088 = vrot.lane.b32.xlu0 %v1035, 32
      %v1089 = vpop.permute.xlu0 %1088
      %1090 = vrot.lane.b32.xlu0 %v1043, 32
      %v1091 = vpop.permute.xlu0 %1090
      %v1093 = vunpack.c.l.b16 %v292
      %v1094 = vpack.c.b16 %v350, %v1093
      %v1095 = vrot.slane %v1094, 1
      %v1096 = vrot.slane %v774, 1
      %v1097 = vsel %vm669, %v1095, %v1096
      %v1098 = vrot.slane %v775, 1
      %v1099 = vsel %vm669, %v1096, %v1098
      %v1100 = vrot.slane %v776, 1
      %v1101 = vsel %vm669, %v1098, %v1100
      %v1102 = vrot.slane %v777, 1
      %v1103 = vsel %vm669, %v1100, %v1102
      %v1104 = vrot.slane %v778, 1
      %v1105 = vsel %vm669, %v1102, %v1104
      %v1106 = vrot.slane %v779, 1
      %v1107 = vsel %vm669, %v1104, %v1106
      %v1108 = vrot.slane %v780, 1
      %v1109 = vsel %vm669, %v1106, %v1108
      %v1110 = vrot.slane %v781, 1
      %v1111 = vsel %vm669, %v1108, %v1110
      %v1112 = vrot.slane %v782, 1
      %v1113 = vsel %vm669, %v1110, %v1112
      %v1114 = vrot.slane %v783, 1
      %v1115 = vsel %vm669, %v1112, %v1114
      %v1116 = vrot.slane %v784, 1
      %v1117 = vsel %vm669, %v1114, %v1116
      %v1118 = vrot.slane %v785, 1
      %v1119 = vsel %vm669, %v1116, %v1118
      %v1120 = vrot.slane %v786, 1
      %v1121 = vsel %vm669, %v1118, %v1120
      %v1122 = vrot.slane %v787, 1
      %v1123 = vsel %vm669, %v1120, %v1122
      %v1124 = vrot.slane %v788, 1
      %v1125 = vsel %vm669, %v1122, %v1124
      %v1126 = vrot.slane %v789, 1
      %v1127 = vsel %vm669, %v1124, %v1126
      %v1128 = vrot.slane %v790, 1
      %v1129 = vsel %vm669, %v1126, %v1128
      %v1130 = vrot.slane %v791, 1
      %v1131 = vsel %vm669, %v1128, %v1130
      %v1132 = vrot.slane %v792, 1
      %v1133 = vsel %vm669, %v1130, %v1132
      %v1134 = vrot.slane %v793, 1
      %v1135 = vsel %vm669, %v1132, %v1134
      %v1136 = vrot.slane %v794, 1
      %v1137 = vsel %vm669, %v1134, %v1136
      %v1138 = vrot.slane %v795, 1
      %v1139 = vsel %vm669, %v1136, %v1138
      %v1140 = vrot.slane %v796, 1
      %v1141 = vsel %vm669, %v1138, %v1140
      %v1142 = vrot.slane %v847, 1
      %v1143 = vsel %vm669, %v1140, %v1142
      %1144 = vrot.lane.b32.xlu0 %v1097, 40
      %v1145 = vpop.permute.xlu0 %1144
      %1146 = vrot.lane.b32.xlu0 %v1099, 40
      %v1147 = vpop.permute.xlu0 %1146
      %1148 = vrot.lane.b32.xlu0 %v1101, 40
      %v1149 = vpop.permute.xlu0 %1148
      %1150 = vrot.lane.b32.xlu0 %v1103, 40
      %v1151 = vpop.permute.xlu0 %1150
      %1152 = vrot.lane.b32.xlu0 %v1105, 40
      %v1153 = vpop.permute.xlu0 %1152
      %1154 = vrot.lane.b32.xlu0 %v1107, 40
      %v1155 = vpop.permute.xlu0 %1154
      %1156 = vrot.lane.b32.xlu0 %v1109, 40
      %v1157 = vpop.permute.xlu0 %1156
      %1158 = vrot.lane.b32.xlu0 %v1111, 40
      %v1159 = vpop.permute.xlu0 %1158
      %1160 = vrot.lane.b32.xlu0 %v1113, 40
      %v1161 = vpop.permute.xlu0 %1160
      %1162 = vrot.lane.b32.xlu0 %v1115, 40
      %v1163 = vpop.permute.xlu0 %1162
      %1164 = vrot.lane.b32.xlu0 %v1117, 40
      %v1165 = vpop.permute.xlu0 %1164
      %1166 = vrot.lane.b32.xlu0 %v1119, 40
      %v1167 = vpop.permute.xlu0 %1166
      %1168 = vrot.lane.b32.xlu0 %v1121, 40
      %v1169 = vpop.permute.xlu0 %1168
      %1170 = vrot.lane.b32.xlu0 %v1123, 40
      %v1171 = vpop.permute.xlu0 %1170
      %1172 = vrot.lane.b32.xlu0 %v1125, 40
      %v1173 = vpop.permute.xlu0 %1172
      %1174 = vrot.lane.b32.xlu0 %v1127, 40
      %v1175 = vpop.permute.xlu0 %1174
      %1176 = vrot.lane.b32.xlu0 %v1129, 40
      %v1177 = vpop.permute.xlu0 %1176
      %1178 = vrot.lane.b32.xlu0 %v1131, 40
      %v1179 = vpop.permute.xlu0 %1178
      %1180 = vrot.lane.b32.xlu0 %v1133, 40
      %v1181 = vpop.permute.xlu0 %1180
      %1182 = vrot.lane.b32.xlu0 %v1135, 40
      %v1183 = vpop.permute.xlu0 %1182
      %1184 = vrot.lane.b32.xlu0 %v1137, 40
      %v1185 = vpop.permute.xlu0 %1184
      %1186 = vrot.lane.b32.xlu0 %v1139, 40
      %v1187 = vpop.permute.xlu0 %1186
      %1188 = vrot.lane.b32.xlu0 %v1141, 40
      %v1189 = vpop.permute.xlu0 %1188
      %1190 = vrot.lane.b32.xlu0 %v1143, 40
      %v1191 = vpop.permute.xlu0 %1190
      %v1195 = vunpack.c.l.b16 %v293
      %v1196 = vunpack.c.l.b16 %v294
      %v1197 = vunpack.c.l.b16 %v295
      %v1198 = vpack.c.b16 %v771, %v770
      %v1199 = vpack.c.b16 %v1195, %v772
      %v1200 = vpack.c.b16 %v1197, %v1196
      %1201 = vrot.lane.b32.xlu0 %v397, 48
      %v1202 = vpop.permute.xlu0 %1201
      %1203 = vrot.lane.b32.xlu0 %v398, 48
      %v1204 = vpop.permute.xlu0 %1203
      %1205 = vrot.lane.b32.xlu0 %v399, 48
      %v1206 = vpop.permute.xlu0 %1205
      %1207 = vrot.lane.b32.xlu0 %v400, 48
      %v1208 = vpop.permute.xlu0 %1207
      %1209 = vrot.lane.b32.xlu0 %v401, 48
      %v1210 = vpop.permute.xlu0 %1209
      %1211 = vrot.lane.b32.xlu0 %v402, 48
      %v1212 = vpop.permute.xlu0 %1211
      %1213 = vrot.lane.b32.xlu0 %v403, 48
      %v1214 = vpop.permute.xlu0 %1213
      %1215 = vrot.lane.b32.xlu0 %v404, 48
      %v1216 = vpop.permute.xlu0 %1215
      %1217 = vrot.lane.b32.xlu0 %v405, 48
      %v1218 = vpop.permute.xlu0 %1217
      %1219 = vrot.lane.b32.xlu0 %v406, 48
      %v1220 = vpop.permute.xlu0 %1219
      %1221 = vrot.lane.b32.xlu0 %v407, 48
      %v1222 = vpop.permute.xlu0 %1221
      %1223 = vrot.lane.b32.xlu0 %v408, 48
      %v1224 = vpop.permute.xlu0 %1223
      %1225 = vrot.lane.b32.xlu0 %v409, 48
      %v1226 = vpop.permute.xlu0 %1225
      %1227 = vrot.lane.b32.xlu0 %v410, 48
      %v1228 = vpop.permute.xlu0 %1227
      %1229 = vrot.lane.b32.xlu0 %v411, 48
      %v1230 = vpop.permute.xlu0 %1229
      %1231 = vrot.lane.b32.xlu0 %v412, 48
      %v1232 = vpop.permute.xlu0 %1231
      %1233 = vrot.lane.b32.xlu0 %v413, 48
      %v1234 = vpop.permute.xlu0 %1233
      %1235 = vrot.lane.b32.xlu0 %v414, 48
      %v1236 = vpop.permute.xlu0 %1235
      %1237 = vrot.lane.b32.xlu0 %v415, 48
      %v1238 = vpop.permute.xlu0 %1237
      %1239 = vrot.lane.b32.xlu0 %v416, 48
      %v1240 = vpop.permute.xlu0 %1239
      %1241 = vrot.lane.b32.xlu0 %v417, 48
      %v1242 = vpop.permute.xlu0 %1241
      %1243 = vrot.lane.b32.xlu0 %v1198, 48
      %v1244 = vpop.permute.xlu0 %1243
      %1245 = vrot.lane.b32.xlu0 %v1199, 48
      %v1246 = vpop.permute.xlu0 %1245
      %1247 = vrot.lane.b32.xlu0 %v1200, 48
      %v1248 = vpop.permute.xlu0 %1247
      %v1250 = vunpack.c.l.b16 %v296
      %v1251 = vpack.c.b16 %v1250, %v1250
      %v1253 = vshll.u32 %v1198, 16
      %v1255 = vrot.slane %v1253, 1
      %v1256 = vsel %vm421, %v612, %v1255
      %v1257 = vshrl.u32 %v1198, 16
      %v1259 = vor.u32 %v1257, %v1255
      %v1261 = vshll.u32 %v1199, 16
      %v1263 = vrot.slane %v1261, 1
      %v1264 = vsel %vm421, %v1259, %v1263
      %v1265 = vshrl.u32 %v1199, 16
      %v1267 = vor.u32 %v1265, %v1263
      %v1269 = vshll.u32 %v1200, 16
      %v1271 = vrot.slane %v1269, 1
      %v1272 = vsel %vm421, %v1267, %v1271
      %v1273 = vshrl.u32 %v1200, 16
      %v1275 = vor.u32 %v1273, %v1271
      %v1277 = vshll.u32 %v1251, 16
      %v1279 = vrot.slane %v1277, 1
      %v1280 = vsel %vm421, %v1275, %v1279
      %1281 = vrot.lane.b32.xlu0 %v457, 56
      %v1282 = vpop.permute.xlu0 %1281
      %1283 = vrot.lane.b32.xlu0 %v465, 56
      %v1284 = vpop.permute.xlu0 %1283
      %1285 = vrot.lane.b32.xlu0 %v473, 56
      %v1286 = vpop.permute.xlu0 %1285
      %1287 = vrot.lane.b32.xlu0 %v481, 56
      %v1288 = vpop.permute.xlu0 %1287
      %1289 = vrot.lane.b32.xlu0 %v489, 56
      %v1290 = vpop.permute.xlu0 %1289
      %1291 = vrot.lane.b32.xlu0 %v497, 56
      %v1292 = vpop.permute.xlu0 %1291
      %1293 = vrot.lane.b32.xlu0 %v505, 56
      %v1294 = vpop.permute.xlu0 %1293
      %1295 = vrot.lane.b32.xlu0 %v513, 56
      %v1296 = vpop.permute.xlu0 %1295
      %1297 = vrot.lane.b32.xlu0 %v521, 56
      %v1298 = vpop.permute.xlu0 %1297
      %1299 = vrot.lane.b32.xlu0 %v529, 56
      %v1300 = vpop.permute.xlu0 %1299
      %1301 = vrot.lane.b32.xlu0 %v537, 56
      %v1302 = vpop.permute.xlu0 %1301
      %1303 = vrot.lane.b32.xlu0 %v545, 56
      %v1304 = vpop.permute.xlu0 %1303
      %1305 = vrot.lane.b32.xlu0 %v553, 56
      %v1306 = vpop.permute.xlu0 %1305
      %1307 = vrot.lane.b32.xlu0 %v561, 56
      %v1308 = vpop.permute.xlu0 %1307
      %1309 = vrot.lane.b32.xlu0 %v569, 56
      %v1310 = vpop.permute.xlu0 %1309
      %1311 = vrot.lane.b32.xlu0 %v577, 56
      %v1312 = vpop.permute.xlu0 %1311
      %1313 = vrot.lane.b32.xlu0 %v585, 56
      %v1314 = vpop.permute.xlu0 %1313
      %1315 = vrot.lane.b32.xlu0 %v593, 56
      %v1316 = vpop.permute.xlu0 %1315
      %1317 = vrot.lane.b32.xlu0 %v601, 56
      %v1318 = vpop.permute.xlu0 %1317
      %1319 = vrot.lane.b32.xlu0 %v609, 56
      %v1320 = vpop.permute.xlu0 %1319
      %1321 = vrot.lane.b32.xlu0 %v1256, 56
      %v1322 = vpop.permute.xlu0 %1321
      %1323 = vrot.lane.b32.xlu0 %v1264, 56
      %v1324 = vpop.permute.xlu0 %1323
      %1325 = vrot.lane.b32.xlu0 %v1272, 56
      %v1326 = vpop.permute.xlu0 %1325
      %1327 = vrot.lane.b32.xlu0 %v1280, 56
      %v1328 = vpop.permute.xlu0 %1327
      %v1330 = vunpack.c.l.b16 %v297
      %v1331 = vpack.c.b16 %v353, %v1330
      %v1332 = vrot.slane %v1331, 1
      %v1333 = vsel %vm669, %v1332, %v677
      %v1334 = vrot.slane %v1198, 1
      %v1335 = vsel %vm669, %v715, %v1334
      %v1336 = vrot.slane %v1199, 1
      %v1337 = vsel %vm669, %v1334, %v1336
      %v1338 = vrot.slane %v1200, 1
      %v1339 = vsel %vm669, %v1336, %v1338
      %v1340 = vrot.slane %v1251, 1
      %v1341 = vsel %vm669, %v1338, %v1340
      %1342 = vrot.lane.b32.xlu0 %v1333, 64
      %v1343 = vpop.permute.xlu0 %1342
      %1344 = vrot.lane.b32.xlu0 %v680, 64
      %v1345 = vpop.permute.xlu0 %1344
      %1346 = vrot.lane.b32.xlu0 %v682, 64
      %v1347 = vpop.permute.xlu0 %1346
      %1348 = vrot.lane.b32.xlu0 %v684, 64
      %v1349 = vpop.permute.xlu0 %1348
      %1350 = vrot.lane.b32.xlu0 %v686, 64
      %v1351 = vpop.permute.xlu0 %1350
      %1352 = vrot.lane.b32.xlu0 %v688, 64
      %v1353 = vpop.permute.xlu0 %1352
      %1354 = vrot.lane.b32.xlu0 %v690, 64
      %v1355 = vpop.permute.xlu0 %1354
      %1356 = vrot.lane.b32.xlu0 %v692, 64
      %v1357 = vpop.permute.xlu0 %1356
      %1358 = vrot.lane.b32.xlu0 %v694, 64
      %v1359 = vpop.permute.xlu0 %1358
      %1360 = vrot.lane.b32.xlu0 %v696, 64
      %v1361 = vpop.permute.xlu0 %1360
      %1362 = vrot.lane.b32.xlu0 %v698, 64
      %v1363 = vpop.permute.xlu0 %1362
      %1364 = vrot.lane.b32.xlu0 %v700, 64
      %v1365 = vpop.permute.xlu0 %1364
      %1366 = vrot.lane.b32.xlu0 %v702, 64
      %v1367 = vpop.permute.xlu0 %1366
      %1368 = vrot.lane.b32.xlu0 %v704, 64
      %v1369 = vpop.permute.xlu0 %1368
      %1370 = vrot.lane.b32.xlu0 %v706, 64
      %v1371 = vpop.permute.xlu0 %1370
      %1372 = vrot.lane.b32.xlu0 %v708, 64
      %v1373 = vpop.permute.xlu0 %1372
      %1374 = vrot.lane.b32.xlu0 %v710, 64
      %v1375 = vpop.permute.xlu0 %1374
      %1376 = vrot.lane.b32.xlu0 %v712, 64
      %v1377 = vpop.permute.xlu0 %1376
      %1378 = vrot.lane.b32.xlu0 %v714, 64
      %v1379 = vpop.permute.xlu0 %1378
      %1380 = vrot.lane.b32.xlu0 %v716, 64
      %v1381 = vpop.permute.xlu0 %1380
      %1382 = vrot.lane.b32.xlu0 %v1335, 64
      %v1383 = vpop.permute.xlu0 %1382
      %1384 = vrot.lane.b32.xlu0 %v1337, 64
      %v1385 = vpop.permute.xlu0 %1384
      %1386 = vrot.lane.b32.xlu0 %v1339, 64
      %v1387 = vpop.permute.xlu0 %1386
      %1388 = vrot.lane.b32.xlu0 %v1341, 64
      %v1389 = vpop.permute.xlu0 %1388
      %vm1390 = vcmask 64512
      %v1392 = vsel %vm1390, %v394, %v619
      %v1394 = vsel %vm1390, %v395, %v621
      %v1396 = vsel %vm1390, %v396, %v623
      %v1398 = vsel %vm1390, %v397, %v625
      %v1400 = vsel %vm1390, %v398, %v627
      %v1402 = vsel %vm1390, %v399, %v629
      %v1404 = vsel %vm1390, %v400, %v631
      %v1406 = vsel %vm1390, %v401, %v633
      %v1408 = vsel %vm1390, %v402, %v635
      %v1410 = vsel %vm1390, %v403, %v637
      %v1412 = vsel %vm1390, %v404, %v639
      %v1414 = vsel %vm1390, %v405, %v641
      %v1416 = vsel %vm1390, %v406, %v643
      %v1418 = vsel %vm1390, %v407, %v645
      %v1420 = vsel %vm1390, %v408, %v647
      %v1422 = vsel %vm1390, %v409, %v649
      %v1424 = vsel %vm1390, %v410, %v651
      %v1426 = vsel %vm1390, %v411, %v653
      %v1428 = vsel %vm1390, %v412, %v655
      %v1430 = vsel %vm1390, %v413, %v657
      %v1432 = vsel %vm1390, %v414, %v659
      %v1434 = vsel %vm1390, %v415, %v661
      %v1436 = vsel %vm1390, %v416, %v663
      %v1438 = vsel %vm1390, %v417, %v665
      %vm1439 = vcmask 130048
      %v1441 = vsel %vm1439, %v1392, %v720
      %v1443 = vsel %vm1439, %v1394, %v722
      %v1445 = vsel %vm1439, %v1396, %v724
      %v1447 = vsel %vm1439, %v1398, %v726
      %v1449 = vsel %vm1439, %v1400, %v728
      %v1451 = vsel %vm1439, %v1402, %v730
      %v1453 = vsel %vm1439, %v1404, %v732
      %v1455 = vsel %vm1439, %v1406, %v734
      %v1457 = vsel %vm1439, %v1408, %v736
      %v1459 = vsel %vm1439, %v1410, %v738
      %v1461 = vsel %vm1439, %v1412, %v740
      %v1463 = vsel %vm1439, %v1414, %v742
      %v1465 = vsel %vm1439, %v1416, %v744
      %v1467 = vsel %vm1439, %v1418, %v746
      %v1469 = vsel %vm1439, %v1420, %v748
      %v1471 = vsel %vm1439, %v1422, %v750
      %v1473 = vsel %vm1439, %v1424, %v752
      %v1475 = vsel %vm1439, %v1426, %v754
      %v1477 = vsel %vm1439, %v1428, %v756
      %v1479 = vsel %vm1439, %v1430, %v758
      %v1481 = vsel %vm1439, %v1432, %v760
      %v1483 = vsel %vm1439, %v1434, %v762
      %v1485 = vsel %vm1439, %v1436, %v764
      %v1487 = vsel %vm1439, %v1438, %v766
      %vm1488 = vcmask 195584
      %v1490 = vsel %vm1488, %v1441, %v798
      %v1492 = vsel %vm1488, %v1443, %v800
      %v1494 = vsel %vm1488, %v1445, %v802
      %v1496 = vsel %vm1488, %v1447, %v804
      %v1498 = vsel %vm1488, %v1449, %v806
      %v1500 = vsel %vm1488, %v1451, %v808
      %v1502 = vsel %vm1488, %v1453, %v810
      %v1504 = vsel %vm1488, %v1455, %v812
      %v1506 = vsel %vm1488, %v1457, %v814
      %v1508 = vsel %vm1488, %v1459, %v816
      %v1510 = vsel %vm1488, %v1461, %v818
      %v1512 = vsel %vm1488, %v1463, %v820
      %v1514 = vsel %vm1488, %v1465, %v822
      %v1516 = vsel %vm1488, %v1467, %v824
      %v1518 = vsel %vm1488, %v1469, %v826
      %v1520 = vsel %vm1488, %v1471, %v828
      %v1522 = vsel %vm1488, %v1473, %v830
      %v1524 = vsel %vm1488, %v1475, %v832
      %v1526 = vsel %vm1488, %v1477, %v834
      %v1528 = vsel %vm1488, %v1479, %v836
      %v1530 = vsel %vm1488, %v1481, %v838
      %v1532 = vsel %vm1488, %v1483, %v840
      %v1534 = vsel %vm1488, %v1485, %v842
      %v1536 = vsel %vm1488, %v1487, %v844
      %vm1537 = vcmask 261120
      %v1539 = vsel %vm1537, %v1490, %v1045
      %v1541 = vsel %vm1537, %v1492, %v1047
      %v1543 = vsel %vm1537, %v1494, %v1049
      %v1545 = vsel %vm1537, %v1496, %v1051
      %v1547 = vsel %vm1537, %v1498, %v1053
      %v1549 = vsel %vm1537, %v1500, %v1055
      %v1551 = vsel %vm1537, %v1502, %v1057
      %v1553 = vsel %vm1537, %v1504, %v1059
      %v1555 = vsel %vm1537, %v1506, %v1061
      %v1557 = vsel %vm1537, %v1508, %v1063
      %v1559 = vsel %vm1537, %v1510, %v1065
      %v1561 = vsel %vm1537, %v1512, %v1067
      %v1563 = vsel %vm1537, %v1514, %v1069
      %v1565 = vsel %vm1537, %v1516, %v1071
      %v1567 = vsel %vm1537, %v1518, %v1073
      %v1569 = vsel %vm1537, %v1520, %v1075
      %v1571 = vsel %vm1537, %v1522, %v1077
      %v1573 = vsel %vm1537, %v1524, %v1079
      %v1575 = vsel %vm1537, %v1526, %v1081
      %v1577 = vsel %vm1537, %v1528, %v1083
      %v1579 = vsel %vm1537, %v1530, %v1085
      %v1581 = vsel %vm1537, %v1532, %v1087
      %v1583 = vsel %vm1537, %v1534, %v1089
      %v1585 = vsel %vm1537, %v1536, %v1091
      %vm1586 = vcmask 326656
      %v1588 = vsel %vm1586, %v1539, %v1145
      %v1590 = vsel %vm1586, %v1541, %v1147
      %v1592 = vsel %vm1586, %v1543, %v1149
      %v1594 = vsel %vm1586, %v1545, %v1151
      %v1596 = vsel %vm1586, %v1547, %v1153
      %v1598 = vsel %vm1586, %v1549, %v1155
      %v1600 = vsel %vm1586, %v1551, %v1157
      %v1602 = vsel %vm1586, %v1553, %v1159
      %v1604 = vsel %vm1586, %v1555, %v1161
      %v1606 = vsel %vm1586, %v1557, %v1163
      %v1608 = vsel %vm1586, %v1559, %v1165
      %v1610 = vsel %vm1586, %v1561, %v1167
      %v1612 = vsel %vm1586, %v1563, %v1169
      %v1614 = vsel %vm1586, %v1565, %v1171
      %v1616 = vsel %vm1586, %v1567, %v1173
      %v1618 = vsel %vm1586, %v1569, %v1175
      %v1620 = vsel %vm1586, %v1571, %v1177
      %v1622 = vsel %vm1586, %v1573, %v1179
      %v1624 = vsel %vm1586, %v1575, %v1181
      %v1626 = vsel %vm1586, %v1577, %v1183
      %v1628 = vsel %vm1586, %v1579, %v1185
      %v1630 = vsel %vm1586, %v1581, %v1187
      %v1632 = vsel %vm1586, %v1583, %v1189
      %v1634 = vsel %vm1586, %v1585, %v1191
      %vm1635 = vcmask 392192
      %v1637 = vsel %vm1635, %v1588, %v1202
      %v1639 = vsel %vm1635, %v1590, %v1204
      %v1641 = vsel %vm1635, %v1592, %v1206
      %v1643 = vsel %vm1635, %v1594, %v1208
      %v1645 = vsel %vm1635, %v1596, %v1210
      %v1647 = vsel %vm1635, %v1598, %v1212
      %v1649 = vsel %vm1635, %v1600, %v1214
      %v1651 = vsel %vm1635, %v1602, %v1216
      %v1653 = vsel %vm1635, %v1604, %v1218
      %v1655 = vsel %vm1635, %v1606, %v1220
      %v1657 = vsel %vm1635, %v1608, %v1222
      %v1659 = vsel %vm1635, %v1610, %v1224
      %v1661 = vsel %vm1635, %v1612, %v1226
      %v1663 = vsel %vm1635, %v1614, %v1228
      %v1665 = vsel %vm1635, %v1616, %v1230
      %v1667 = vsel %vm1635, %v1618, %v1232
      %v1669 = vsel %vm1635, %v1620, %v1234
      %v1671 = vsel %vm1635, %v1622, %v1236
      %v1673 = vsel %vm1635, %v1624, %v1238
      %v1675 = vsel %vm1635, %v1626, %v1240
      %v1677 = vsel %vm1635, %v1628, %v1242
      %v1679 = vsel %vm1635, %v1630, %v1244
      %v1681 = vsel %vm1635, %v1632, %v1246
      %v1683 = vsel %vm1635, %v1634, %v1248
      %vm1684 = vcmask 457728
      %v1686 = vsel %vm1684, %v1637, %v1282
      %v1688 = vsel %vm1684, %v1639, %v1284
      %v1690 = vsel %vm1684, %v1641, %v1286
      %v1692 = vsel %vm1684, %v1643, %v1288
      %v1694 = vsel %vm1684, %v1645, %v1290
      %v1696 = vsel %vm1684, %v1647, %v1292
      %v1698 = vsel %vm1684, %v1649, %v1294
      %v1700 = vsel %vm1684, %v1651, %v1296
      %v1702 = vsel %vm1684, %v1653, %v1298
      %v1704 = vsel %vm1684, %v1655, %v1300
      %v1706 = vsel %vm1684, %v1657, %v1302
      %v1708 = vsel %vm1684, %v1659, %v1304
      %v1710 = vsel %vm1684, %v1661, %v1306
      %v1712 = vsel %vm1684, %v1663, %v1308
      %v1714 = vsel %vm1684, %v1665, %v1310
      %v1716 = vsel %vm1684, %v1667, %v1312
      %v1718 = vsel %vm1684, %v1669, %v1314
      %v1720 = vsel %vm1684, %v1671, %v1316
      %v1722 = vsel %vm1684, %v1673, %v1318
      %v1724 = vsel %vm1684, %v1675, %v1320
      %v1726 = vsel %vm1684, %v1677, %v1322
      %v1728 = vsel %vm1684, %v1679, %v1324
      %v1730 = vsel %vm1684, %v1681, %v1326
      %v1732 = vsel %vm1684, %v1683, %v1328
      %vm1733 = vcmask 523264
      %v1735 = vsel %vm1733, %v1686, %v1343
      %v1737 = vsel %vm1733, %v1688, %v1345
      %v1739 = vsel %vm1733, %v1690, %v1347
      %v1741 = vsel %vm1733, %v1692, %v1349
      %v1743 = vsel %vm1733, %v1694, %v1351
      %v1745 = vsel %vm1733, %v1696, %v1353
      %v1747 = vsel %vm1733, %v1698, %v1355
      %v1749 = vsel %vm1733, %v1700, %v1357
      %v1751 = vsel %vm1733, %v1702, %v1359
      %v1753 = vsel %vm1733, %v1704, %v1361
      %v1755 = vsel %vm1733, %v1706, %v1363
      %v1757 = vsel %vm1733, %v1708, %v1365
      %v1759 = vsel %vm1733, %v1710, %v1367
      %v1761 = vsel %vm1733, %v1712, %v1369
      %v1763 = vsel %vm1733, %v1714, %v1371
      %v1765 = vsel %vm1733, %v1716, %v1373
      %v1767 = vsel %vm1733, %v1718, %v1375
      %v1769 = vsel %vm1733, %v1720, %v1377
      %v1771 = vsel %vm1733, %v1722, %v1379
      %v1773 = vsel %vm1733, %v1724, %v1381
      %v1775 = vsel %vm1733, %v1726, %v1383
      %v1777 = vsel %vm1733, %v1728, %v1385
      %v1779 = vsel %vm1733, %v1730, %v1387
      %v1781 = vsel %vm1733, %v1732, %v1389
      %vm1782 = vcmask 588800
      %v1784 = vsel %vm1782, %v1735, 0
      %v1786 = vsel %vm1782, %v1737, 0
      %v1788 = vsel %vm1782, %v1739, 0
      %v1790 = vsel %vm1782, %v1741, 0
      %v1792 = vsel %vm1782, %v1743, 0
      %v1794 = vsel %vm1782, %v1745, 0
      %v1796 = vsel %vm1782, %v1747, 0
      %v1798 = vsel %vm1782, %v1749, 0
      %v1800 = vsel %vm1782, %v1751, 0
      %v1802 = vsel %vm1782, %v1753, 0
      %v1804 = vsel %vm1782, %v1755, 0
      %v1806 = vsel %vm1782, %v1757, 0
      %v1808 = vsel %vm1782, %v1759, 0
      %v1810 = vsel %vm1782, %v1761, 0
      %v1812 = vsel %vm1782, %v1763, 0
      %v1814 = vsel %vm1782, %v1765, 0
      %v1816 = vsel %vm1782, %v1767, 0
      %v1818 = vsel %vm1782, %v1769, 0
      %v1820 = vsel %vm1782, %v1771, 0
      %v1822 = vsel %vm1782, %v1773, 0
      %v1824 = vsel %vm1782, %v1775, 0
      %v1826 = vsel %vm1782, %v1777, 0
      %v1828 = vsel %vm1782, %v1779, 0
      %v1830 = vsel %vm1782, %v1781, 0
      %v1832 = vld [vmem:[%s1] sm:$0xf]
      %v1833 = vld [vmem:[%s1 + $0x4] sm:$0xf]
      %v1834 = vld [vmem:[%s1 + $0x8] sm:$0xf]
      %v1835 = vld [vmem:[%s1 + $0xc] sm:$0xf]
      %v1836 = vld [vmem:[%s1 + $0x10] sm:$0xf]
      %v1837 = vld [vmem:[%s1 + $0x14] sm:$0xf]
      %v1838 = vld [vmem:[%s1 + $0x18] sm:$0xf]
      %v1839 = vld [vmem:[%s1 + $0x1c] sm:$0xf]
      %v1840 = vld [vmem:[%s1 + $0x20] sm:$0xf]
      %v1841 = vld [vmem:[%s1 + $0x24] sm:$0xf]
      %v1842 = vld [vmem:[%s1 + $0x28] sm:$0xf]
      %v1843 = vld [vmem:[%s1 + $0x2c] sm:$0xf]
      %v1844 = vld [vmem:[%s1 + $0x30] sm:$0xf]
      %v1845 = vld [vmem:[%s1 + $0x34] sm:$0xf]
      %v1846 = vld [vmem:[%s1 + $0x38] sm:$0xf]
      %v1847 = vld [vmem:[%s1 + $0x3c] sm:$0xf]
      %v1848 = vld [vmem:[%s2] sm:$0x1]
      %v1850 = vperm.slane %v1848, 0
      %v1868 = vunpack.c.l.b16 %v1832
      %v1869 = vunpack.c.l.b16 %v1833
      %v1870 = vunpack.c.l.b16 %v1834
      %v1871 = vunpack.c.l.b16 %v1835
      %v1872 = vunpack.c.l.b16 %v1836
      %v1873 = vunpack.c.l.b16 %v1837
      %v1874 = vunpack.c.l.b16 %v1838
      %v1875 = vunpack.c.l.b16 %v1839
      %v1876 = vunpack.c.l.b16 %v1840
      %v1877 = vunpack.c.l.b16 %v1841
      %v1878 = vunpack.c.l.b16 %v1842
      %v1879 = vunpack.c.l.b16 %v1843
      %v1880 = vunpack.c.l.b16 %v1844
      %v1881 = vunpack.c.l.b16 %v1845
      %v1882 = vunpack.c.l.b16 %v1846
      %v1883 = vunpack.c.l.b16 %v1847
      %v1884 = vpack.c.b16 %v1869, %v1868
      %v1885 = vpack.c.b16 %v1871, %v1870
      %v1886 = vpack.c.b16 %v1873, %v1872
      %v1887 = vpack.c.b16 %v1875, %v1874
      %v1888 = vpack.c.b16 %v1877, %v1876
      %v1889 = vpack.c.b16 %v1879, %v1878
      %v1890 = vpack.c.b16 %v1881, %v1880
      %v1891 = vpack.c.b16 %v1883, %v1882
      %1900 = vmatpush.bf16.msra.mxu0 %v1891
      %1901 = vmatpush.bf16.msra.mxu0 %v1890
      %1902 = vmatpush.bf16.msra.mxu0 %v1889
      %1903 = vmatpush.bf16.msra.mxu0 %v1888
      %1904 = vmatpush.bf16.msra.mxu0 %v1887
      %1905 = vmatpush.bf16.msra.mxu0 %v1886
      %1906 = vmatpush.bf16.msra.mxu0 %v1885
      %1907 = vmatpush.bf16.msra.mxu0 %v1884
      %1908 = vmatmul.bf16.gmra.mxu0 %v1784
      %v1909 = vpop.f32.mrf.mxu0
      %v1910 = vadd.f32 %v1850, %v1909
      %v1911 = vpop.f32.mrf.mxu0
      %v1912 = vadd.f32 %v1850, %v1911
      %1913 = vmatmul.bf16.gmra.mxu0 %v1786
      %v1914 = vpop.f32.mrf.mxu0
      %v1915 = vpop.f32.mrf.mxu0
      %v1916 = vadd.f32 %v1850, %v1915
      %1917 = vmatmul.bf16.gmra.mxu0 %v1788
      %v1918 = vpop.f32.mrf.mxu0
      %v1919 = vadd.f32 %v1850, %v1918
      %v1920 = vpop.f32.mrf.mxu0
      %1921 = vmatmul.bf16.gmra.mxu0 %v1790
      %v1922 = vpop.f32.mrf.mxu0
      %v1923 = vadd.f32 %v1850, %v1922
      %v1924 = vpop.f32.mrf.mxu0
      %v1925 = vadd.f32 %v1850, %v1924
      %1926 = vmatmul.bf16.gmra.mxu0 %v1792
      %v1927 = vpop.f32.mrf.mxu0
      %v1928 = vpop.f32.mrf.mxu0
      %v1929 = vadd.f32 %v1850, %v1928
      %1930 = vmatmul.bf16.gmra.mxu0 %v1794
      %v1931 = vpop.f32.mrf.mxu0
      %v1932 = vadd.f32 %v1850, %v1931
      %v1933 = vpop.f32.mrf.mxu0
      %1934 = vmatmul.bf16.gmra.mxu0 %v1796
      %v1935 = vpop.f32.mrf.mxu0
      %v1936 = vadd.f32 %v1850, %v1935
      %v1937 = vpop.f32.mrf.mxu0
      %v1938 = vadd.f32 %v1850, %v1937
      %1939 = vmatmul.bf16.gmra.mxu0 %v1798
      %v1940 = vpop.f32.mrf.mxu0
      %v1941 = vpop.f32.mrf.mxu0
      %v1942 = vadd.f32 %v1850, %v1941
      %1943 = vmatmul.bf16.gmra.mxu0 %v1800
      %v1944 = vpop.f32.mrf.mxu0
      %v1945 = vadd.f32 %v1850, %v1944
      %v1946 = vpop.f32.mrf.mxu0
      %1947 = vmatmul.bf16.gmra.mxu0 %v1802
      %v1948 = vpop.f32.mrf.mxu0
      %v1949 = vadd.f32 %v1850, %v1948
      %v1950 = vpop.f32.mrf.mxu0
      %v1951 = vadd.f32 %v1850, %v1950
      %1952 = vmatmul.bf16.gmra.mxu0 %v1804
      %v1953 = vpop.f32.mrf.mxu0
      %v1954 = vpop.f32.mrf.mxu0
      %v1955 = vadd.f32 %v1850, %v1954
      %1956 = vmatmul.bf16.gmra.mxu0 %v1806
      %v1957 = vpop.f32.mrf.mxu0
      %v1958 = vadd.f32 %v1850, %v1957
      %v1959 = vpop.f32.mrf.mxu0
      %1960 = vmatmul.bf16.gmra.mxu0 %v1808
      %v1961 = vpop.f32.mrf.mxu0
      %v1962 = vadd.f32 %v1850, %v1961
      %v1963 = vpop.f32.mrf.mxu0
      %v1964 = vadd.f32 %v1850, %v1963
      %1965 = vmatmul.bf16.gmra.mxu0 %v1810
      %v1966 = vpop.f32.mrf.mxu0
      %v1967 = vpop.f32.mrf.mxu0
      %v1968 = vadd.f32 %v1850, %v1967
      %1969 = vmatmul.bf16.gmra.mxu0 %v1812
      %v1970 = vpop.f32.mrf.mxu0
      %v1971 = vadd.f32 %v1850, %v1970
      %v1972 = vpop.f32.mrf.mxu0
      %1973 = vmatmul.bf16.gmra.mxu0 %v1814
      %v1974 = vpop.f32.mrf.mxu0
      %v1975 = vadd.f32 %v1850, %v1974
      %v1976 = vpop.f32.mrf.mxu0
      %v1977 = vadd.f32 %v1850, %v1976
      %1978 = vmatmul.bf16.gmra.mxu0 %v1816
      %v1979 = vpop.f32.mrf.mxu0
      %v1980 = vpop.f32.mrf.mxu0
      %v1981 = vadd.f32 %v1850, %v1980
      %1982 = vmatmul.bf16.gmra.mxu0 %v1818
      %v1983 = vpop.f32.mrf.mxu0
      %v1984 = vadd.f32 %v1850, %v1983
      %v1985 = vpop.f32.mrf.mxu0
      %1986 = vmatmul.bf16.gmra.mxu0 %v1820
      %v1987 = vpop.f32.mrf.mxu0
      %v1988 = vadd.f32 %v1850, %v1987
      %v1989 = vpop.f32.mrf.mxu0
      %v1990 = vadd.f32 %v1850, %v1989
      %1991 = vmatmul.bf16.gmra.mxu0 %v1822
      %v1992 = vpop.f32.mrf.mxu0
      %v1993 = vpop.f32.mrf.mxu0
      %v1994 = vadd.f32 %v1850, %v1993
      %1995 = vmatmul.bf16.gmra.mxu0 %v1824
      %v1996 = vpop.f32.mrf.mxu0
      %v1997 = vadd.f32 %v1850, %v1996
      %v1998 = vpop.f32.mrf.mxu0
      %1999 = vmatmul.bf16.gmra.mxu0 %v1826
      %v2000 = vpop.f32.mrf.mxu0
      %v2001 = vadd.f32 %v1850, %v2000
      %v2002 = vpop.f32.mrf.mxu0
      %v2003 = vadd.f32 %v1850, %v2002
      %2004 = vmatmul.bf16.gmra.mxu0 %v1828
      %v2005 = vpop.f32.mrf.mxu0
      %v2006 = vpop.f32.mrf.mxu0
      %v2007 = vadd.f32 %v1850, %v2006
      %2008 = vmatmul.bf16.gmra.mxu0 %v1830
      %v2009 = vpop.f32.mrf.mxu0
      %v2010 = vadd.f32 %v1850, %v2009
      %v2011 = vpop.f32.mrf.mxu0
      %2012 = vdwg.mxu0
      %vm2013 = vcmp.gt.f32.partialorder %v1910, 0.0
      %vm2014 = vcmp.gt.f32.partialorder %v1912, 0.0
      %vm2015 = vcmp.gt.f32.partialorder %v1916, 0.0
      %vm2016 = vcmp.gt.f32.partialorder %v1919, 0.0
      %vm2017 = vcmp.gt.f32.partialorder %v1923, 0.0
      %vm2018 = vcmp.gt.f32.partialorder %v1925, 0.0
      %vm2019 = vcmp.gt.f32.partialorder %v1929, 0.0
      %vm2020 = vcmp.gt.f32.partialorder %v1932, 0.0
      %vm2021 = vcmp.gt.f32.partialorder %v1936, 0.0
      %vm2022 = vcmp.gt.f32.partialorder %v1938, 0.0
      %vm2023 = vcmp.gt.f32.partialorder %v1942, 0.0
      %vm2024 = vcmp.gt.f32.partialorder %v1945, 0.0
      %vm2025 = vcmp.gt.f32.partialorder %v1949, 0.0
      %vm2026 = vcmp.gt.f32.partialorder %v1951, 0.0
      %vm2027 = vcmp.gt.f32.partialorder %v1955, 0.0
      %vm2028 = vcmp.gt.f32.partialorder %v1958, 0.0
      %vm2029 = vcmp.gt.f32.partialorder %v1962, 0.0
      %vm2030 = vcmp.gt.f32.partialorder %v1964, 0.0
      %vm2031 = vcmp.gt.f32.partialorder %v1968, 0.0
      %vm2032 = vcmp.gt.f32.partialorder %v1971, 0.0
      %vm2033 = vcmp.gt.f32.partialorder %v1975, 0.0
      %vm2034 = vcmp.gt.f32.partialorder %v1977, 0.0
      %vm2035 = vcmp.gt.f32.partialorder %v1981, 0.0
      %vm2036 = vcmp.gt.f32.partialorder %v1984, 0.0
      %vm2037 = vcmp.gt.f32.partialorder %v1988, 0.0
      %vm2038 = vcmp.gt.f32.partialorder %v1990, 0.0
      %vm2039 = vcmp.gt.f32.partialorder %v1994, 0.0
      %vm2040 = vcmp.gt.f32.partialorder %v1997, 0.0
      %vm2041 = vcmp.gt.f32.partialorder %v2001, 0.0
      %vm2042 = vcmp.gt.f32.partialorder %v2003, 0.0
      %vm2043 = vcmp.gt.f32.partialorder %v2007, 0.0
      %vm2044 = vcmp.gt.f32.partialorder %v2010, 0.0
      %v2045 = vld [vmem:[%s3] sm:$0x1]
      %v2047 = vperm.slane %v2045, 0
      %v2049 = vmul.f32 %v2047, %v1910
      %v2050 = vmul.f32 %v2047, %v1912
      %v2051 = vmul.f32 %v2047, %v1916
      %v2052 = vmul.f32 %v2047, %v1919
      %v2053 = vmul.f32 %v2047, %v1923
      %v2054 = vmul.f32 %v2047, %v1925
      %v2055 = vmul.f32 %v2047, %v1929
      %v2056 = vmul.f32 %v2047, %v1932
      %v2057 = vmul.f32 %v2047, %v1936
      %v2058 = vmul.f32 %v2047, %v1938
      %v2059 = vmul.f32 %v2047, %v1942
      %v2060 = vmul.f32 %v2047, %v1945
      %v2061 = vmul.f32 %v2047, %v1949
      %v2062 = vmul.f32 %v2047, %v1951
      %v2063 = vmul.f32 %v2047, %v1955
      %v2064 = vmul.f32 %v2047, %v1958
      %v2065 = vmul.f32 %v2047, %v1962
      %v2066 = vmul.f32 %v2047, %v1964
      %v2067 = vmul.f32 %v2047, %v1968
      %v2068 = vmul.f32 %v2047, %v1971
      %v2069 = vmul.f32 %v2047, %v1975
      %v2070 = vmul.f32 %v2047, %v1977
      %v2071 = vmul.f32 %v2047, %v1981
      %v2072 = vmul.f32 %v2047, %v1984
      %v2073 = vmul.f32 %v2047, %v1988
      %v2074 = vmul.f32 %v2047, %v1990
      %v2075 = vmul.f32 %v2047, %v1994
      %v2076 = vmul.f32 %v2047, %v1997
      %v2077 = vmul.f32 %v2047, %v2001
      %v2078 = vmul.f32 %v2047, %v2003
      %v2079 = vmul.f32 %v2047, %v2007
      %v2080 = vmul.f32 %v2047, %v2010
      %v2081 = vsel %vm2013, %v1910, %v2049
      %v2082 = vsel %vm2014, %v1912, %v2050
      %v2083 = vsel %vm2015, %v1916, %v2051
      %v2084 = vsel %vm2016, %v1919, %v2052
      %v2085 = vsel %vm2017, %v1923, %v2053
      %v2086 = vsel %vm2018, %v1925, %v2054
      %v2087 = vsel %vm2019, %v1929, %v2055
      %v2088 = vsel %vm2020, %v1932, %v2056
      %v2089 = vsel %vm2021, %v1936, %v2057
      %v2090 = vsel %vm2022, %v1938, %v2058
      %v2091 = vsel %vm2023, %v1942, %v2059
      %v2092 = vsel %vm2024, %v1945, %v2060
      %v2093 = vsel %vm2025, %v1949, %v2061
      %v2094 = vsel %vm2026, %v1951, %v2062
      %v2095 = vsel %vm2027, %v1955, %v2063
      %v2096 = vsel %vm2028, %v1958, %v2064
      %v2097 = vsel %vm2029, %v1962, %v2065
      %v2098 = vsel %vm2030, %v1964, %v2066
      %v2099 = vsel %vm2031, %v1968, %v2067
      %v2100 = vsel %vm2032, %v1971, %v2068
      %v2101 = vsel %vm2033, %v1975, %v2069
      %v2102 = vsel %vm2034, %v1977, %v2070
      %v2103 = vsel %vm2035, %v1981, %v2071
      %v2104 = vsel %vm2036, %v1984, %v2072
      %v2105 = vsel %vm2037, %v1988, %v2073
      %v2106 = vsel %vm2038, %v1990, %v2074
      %v2107 = vsel %vm2039, %v1994, %v2075
      %v2108 = vsel %vm2040, %v1997, %v2076
      %v2109 = vsel %vm2041, %v2001, %v2077
      %v2110 = vsel %vm2042, %v2003, %v2078
      %v2111 = vsel %vm2043, %v2007, %v2079
      %v2112 = vsel %vm2044, %v2010, %v2080
      %2113 = vst [vmem:[%s235] sm:$0xff] %v2081
      %2114 = vst [vmem:[%s235 + $0x8] sm:$0xff] %v2082
      %2115 = vst [vmem:[%s235 + $0x10] sm:$0xff] %v2083
      %2116 = vst [vmem:[%s235 + $0x18] sm:$0xff] %v2084
      %2117 = vst [vmem:[%s235 + $0x20] sm:$0xff] %v2085
      %2118 = vst [vmem:[%s235 + $0x28] sm:$0xff] %v2086
      %2119 = vst [vmem:[%s235 + $0x30] sm:$0xff] %v2087
      %2120 = vst [vmem:[%s235 + $0x38] sm:$0xff] %v2088
      %2121 = vst [vmem:[%s235 + $0x40] sm:$0xff] %v2089
      %2122 = vst [vmem:[%s235 + $0x48] sm:$0xff] %v2090
      %2123 = vst [vmem:[%s235 + $0x50] sm:$0xff] %v2091
      %2124 = vst [vmem:[%s235 + $0x58] sm:$0xff] %v2092
      %2125 = vst [vmem:[%s235 + $0x60] sm:$0xff] %v2093
      %2126 = vst [vmem:[%s235 + $0x68] sm:$0xff] %v2094
      %2127 = vst [vmem:[%s235 + $0x70] sm:$0xff] %v2095
      %2128 = vst [vmem:[%s235 + $0x78] sm:$0xff] %v2096
      %2129 = vst [vmem:[%s235 + $0x80] sm:$0xff] %v2097
      %2130 = vst [vmem:[%s235 + $0x88] sm:$0xff] %v2098
      %2131 = vst [vmem:[%s235 + $0x90] sm:$0xff] %v2099
      %2132 = vst [vmem:[%s235 + $0x98] sm:$0xff] %v2100
      %2133 = vst [vmem:[%s235 + $0xa0] sm:$0xff] %v2101
      %2134 = vst [vmem:[%s235 + $0xa8] sm:$0xff] %v2102
      %2135 = vst [vmem:[%s235 + $0xb0] sm:$0xff] %v2103
      %2136 = vst [vmem:[%s235 + $0xb8] sm:$0xff] %v2104
      %2137 = vst [vmem:[%s235 + $0xc0] sm:$0xff] %v2105
      %2138 = vst [vmem:[%s235 + $0xc8] sm:$0xff] %v2106
      %2139 = vst [vmem:[%s235 + $0xd0] sm:$0xff] %v2107
      %2140 = vst [vmem:[%s235 + $0xd8] sm:$0xff] %v2108
      %2141 = vst [vmem:[%s235 + $0xe0] sm:$0xff] %v2109
      %2142 = vst [vmem:[%s235 + $0xe8] sm:$0xff] %v2110
      %2143 = vst [vmem:[%s235 + $0xf0] sm:$0xff] %v2111
      %2144 = vst [vmem:[%s235 + $0xf8] sm:$0xff] %v2112
      %s2145 = smul.u32 16, %s20
      %p2146 = scmp.lt.s32.totalorder %s19, 1
      %s2147 = scalar_select %p2146, %s19, 1
      %p2148 = scmp.lt.s32.totalorder %s2145, 15
      %s2149 = scalar_select %p2148, %s2145, 15
      %s2150 = smul.addr %s2149, 2
      %s2151 = smul.addr %s2147, 32
      %s2152 = sadd.s32 %s2150, %s2151
      %s2153 = smul.addr %s2152, 8
      %s2154 = scalar_lea.vmem %s4, %s2153
      // Predicated region
      $region37: #{pz_conv2d_forward.1} parent=35 // pred_check
        %p2155 = pneg %p138
      $region38: #{pz_conv2d_forward.1} parent=35 // pred_check_branch
        %2157 = sbr.rel (%p2155) target = $region40
      $region39: #{pz_conv2d_forward.1} parent=35 // pred_region
        %s2158 = smul.u32 16, %s20
      $region40: #{pz_conv2d_forward.1} parent=35 // pred_fallthru
        _
    $region36: #{pz_conv2d_forward.1} parent=5 // pred_fallthru
      _
    %p2159 = scmp.le.s32.totalorder 2, %s10
    // Predicated region
    $region41: #{pz_conv2d_forward.1} parent=5 // pred_check
      %p2160 = pneg %p2159
    $region42: #{pz_conv2d_forward.1} parent=5 // pred_check_branch
      %2162 = sbr.rel (%p2160) target = $region44
    $region43: #{pz_conv2d_forward.1} parent=5 // pred_region
      %s2163 = ssub.s32 %s10, 2
      // Predicated region
      $region45: #{pz_conv2d_forward.1} parent=43 // pred_check
        %p2164 = pneg %p144
      $region46: #{pz_conv2d_forward.1} parent=43 // pred_check_branch
        %2166 = sbr.rel (%p2164) target = $region48
      $region47: #{pz_conv2d_forward.1} parent=43 // pred_region
        %s2167 = smul.u32 16, %s22
        %p2168 = scmp.lt.s32.totalorder %s21, 1
        %s2169 = scalar_select %p2168, %s21, 1
        %p2170 = scmp.lt.s32.totalorder %s2167, 15
        %s2171 = scalar_select %p2170, %s2167, 15
        %s2172 = smul.addr %s2171, 2
        %s2173 = smul.addr %s2169, 32
        %s2174 = sadd.s32 %s2172, %s2173
        %s2175 = smul.addr %s2174, 8
        %s2176 = scalar_lea.vmem %s4, %s2175
      $region48: #{pz_conv2d_forward.1} parent=43 // pred_fallthru
        _
    $region44: #{pz_conv2d_forward.1} parent=5 // pred_fallthru
      _
  $region6: #{pz_conv2d_forward.1} parent=0 // loop_footer
    %s14 = sadd.s32 1, %s10
  $region7: #{pz_conv2d_forward.1} parent=0 // loop_footer_branch
    %9 = sbr.rel target = $region3
  $region8: #{pz_conv2d_forward.1} parent=0 // loop_exit
    _

</llo_original>
